<compile_context>
chip_gen: v6e
topology: v6e:2x2x1
jax: 0.10.0
libtpu: 0.0.40
codegen_flags: <defaults>
</compile_context>

<pallas_src>
import functools

import jax
import jax.numpy as jnp
from jax.experimental import pallas as pl
from jax.experimental.pallas import tpu as pltpu

DIM_OBS = 9
DIM_ACTION = 4
HIDDEN = 192               # GRU hidden size
STEM_IN = 12 * 16          # 192
XV_IN = STEM_IN + DIM_OBS  # 201
K_PAD = 256                # lane-aligned padded [x|v] width
GATE_PAD = 256             # padded per-gate width (lane-aligned gate slices)
FC_PAD = 128               # lane-dense output width for the (B,4) action head
LEAK = 0.05


def _leaky(x, slope=LEAK):
    return jnp.where(x > 0, x, slope * x)


# ----------------------------------------------------------------------------
# Shared per-step compute (pure jnp: used inside both kernels AND as the
# bf16-matching reference).
# ----------------------------------------------------------------------------
def _gru_step(xv_bf16, h, w_in, b_v, w_i, w_h, b_rz, b_in, b_hn, w_fc):
    H, G = HIDDEN, GATE_PAD
    # fused stem + v_proj, LeakyReLU(0.05)
    pre = jnp.dot(xv_bf16, w_in, preferred_element_type=jnp.float32) + b_v
    a = _leaky(pre)                                                 # (B,192) f32

    # fused GRU matmuls; gates padded to 256 cols each (offsets 0/256/512)
    gi = jnp.dot(a.astype(jnp.bfloat16), w_i,
                 preferred_element_type=jnp.float32)                # (B,768)
    gh = jnp.dot(h.astype(jnp.bfloat16), w_h,
                 preferred_element_type=jnp.float32)                # (B,768)

    # r/z share one sigmoid over the first 512 (lane-aligned) columns
    rz = jax.nn.sigmoid(gi[:, :2 * G] + gh[:, :2 * G] + b_rz)       # (B,512)
    r = rz[:, :H]                                                   # start 0
    z = rz[:, G:G + H]                                              # start 256
    n = jnp.tanh(gi[:, 2 * G:2 * G + H] + b_in                      # start 512
                 + r * (gh[:, 2 * G:2 * G + H] + b_hn))
    h_new = (1.0 - z) * n + z * h                                   # (B,192) f32

    act = jnp.tanh(jnp.dot(_leaky(h_new).astype(jnp.bfloat16), w_fc,
                           preferred_element_type=jnp.float32))     # (B,128)
    return h_new, act


# ----------------------------------------------------------------------------
# Kernels
# ----------------------------------------------------------------------------
def _step_kernel(xv_ref, h_ref, w_in_ref, b_v_ref, w_i_ref, w_h_ref,
                 b_rz_ref, b_in_ref, b_hn_ref, w_fc_ref,
                 out_ref, hnew_ref):
    h_new, act = _gru_step(xv_ref[...], h_ref[...],
                           w_in_ref[...], b_v_ref[...],
                           w_i_ref[...], w_h_ref[...],
                           b_rz_ref[...], b_in_ref[...], b_hn_ref[...],
                           w_fc_ref[...])
    hnew_ref[...] = h_new
    out_ref[...] = act


def _rollout_kernel(xv_ref, h0_ref, w_in_ref, b_v_ref, w_i_ref, w_h_ref,
                    b_rz_ref, b_in_ref, b_hn_ref, w_fc_ref,
                    act_ref, hout_ref):
    t = pl.program_id(0)

    @pl.when(t == 0)
    def _():
        hout_ref[...] = h0_ref[...]          # seed the resident state block

    h_new, act = _gru_step(xv_ref[0], hout_ref[...],
                           w_in_ref[...], b_v_ref[...],
                           w_i_ref[...], w_h_ref[...],
                           b_rz_ref[...], b_in_ref[...], b_hn_ref[...],
                           w_fc_ref[...])
    hout_ref[...] = h_new                    # carried to the next grid step
    act_ref[0] = act


# ----------------------------------------------------------------------------
# One-time weight packing (hoisted out of the per-call path)
# ----------------------------------------------------------------------------
def prepare_params(params):
    H, G = HIDDEN, GATE_PAD

    # fused [stem | v_proj] weight, contraction dim padded 201 -> 256
    w_in = jnp.zeros((K_PAD, H), jnp.float32)
    w_in = w_in.at[:STEM_IN, :].set(params["w_stem"].T)
    w_in = w_in.at[STEM_IN:XV_IN, :].set(params["w_v"].T)
    w_in = w_in.astype(jnp.bfloat16)                                  # (256,192)
    b_v = params["b_v"].reshape(1, H).astype(jnp.float32)

    def pad_gates(w):        # torch (3H,H) -> (H, 3*G) transposed + gate-padded
        wt = w.T             # (H, 3H), cols = [r | z | n]
        out = jnp.zeros((H, 3 * G), jnp.float32)
        for g in range(3):
            out = out.at[:, g * G:g * G + H].set(wt[:, g * H:(g + 1) * H])
        return out.astype(jnp.bfloat16)

    w_i = pad_gates(params["w_ih"])                                   # (192,768)
    w_h = pad_gates(params["w_hh"])                                   # (192,768)

    b_rz = jnp.zeros((1, 2 * G), jnp.float32)
    b_rz = b_rz.at[0, :H].set(params["b_ih"][:H] + params["b_hh"][:H])
    b_rz = b_rz.at[0, G:G + H].set(params["b_ih"][H:2 * H]
                                   + params["b_hh"][H:2 * H])
    b_in = params["b_ih"][2 * H:].reshape(1, H).astype(jnp.float32)
    b_hn = params["b_hh"][2 * H:].reshape(1, H).astype(jnp.float32)

    w_fc_pad = jnp.zeros((H, FC_PAD), jnp.float32).at[:, :DIM_ACTION].set(
        params["w_fc"].T).astype(jnp.bfloat16)                        # (192,128)

    return dict(w_in=w_in, b_v=b_v, w_i=w_i, w_h=w_h,
                b_rz=b_rz, b_in=b_in, b_hn=b_hn, w_fc_pad=w_fc_pad)


def _pack_xv(x_flat, v):
    """[x | v | 0-pad] -> (..., 256) bf16."""
    pad = jnp.zeros(x_flat.shape[:-1] + (K_PAD - XV_IN,), jnp.float32)
    return jnp.concatenate([x_flat, v, pad], axis=-1).astype(jnp.bfloat16)


# ----------------------------------------------------------------------------
# Single-step forward (jit + hx donation + in-place alias of hx -> h_new)
# ----------------------------------------------------------------------------
def _forward_step(x, v, hx, prep):
    B = x.shape[0]
    xv = _pack_xv(x.reshape(B, -1).astype(jnp.float32), v.astype(jnp.float32))
    vmem = pl.BlockSpec(memory_space=pltpu.MemorySpace.VMEM)
    out_pad, h_new = pl.pallas_call(
        _step_kernel,
        out_shape=(jax.ShapeDtypeStruct((B, FC_PAD), jnp.float32),
                   jax.ShapeDtypeStruct((B, HIDDEN), jnp.float32)),
        in_specs=[vmem] * 10,
        out_specs=(vmem, vmem),
        input_output_aliases={1: 1},   # hx buffer reused for h_new
    )(xv, hx,
      prep["w_in"], prep["b_v"], prep["w_i"], prep["w_h"],
      prep["b_rz"], prep["b_in"], prep["b_hn"], prep["w_fc_pad"])
    return out_pad[:, :DIM_ACTION], h_new


_forward_step_jit = jax.jit(_forward_step, donate_argnums=(2,))


def model_forward(x, v, hx, prep):
    """Single step. x:(B,12,16) v:(B,9) hx:(B,192) or None -> (act(B,4), h(B,192)).
    NOTE: hx is donated (do not reuse it after this call)."""
    if hx is None:
        hx = jnp.zeros((x.shape[0], HIDDEN), jnp.float32)
    return _forward_step_jit(x, v, hx, prep)


# ----------------------------------------------------------------------------
# Rollout forward: T GRU steps inside ONE pallas_call (weights resident)
# ----------------------------------------------------------------------------
def _forward_rollout(xs, vs, h0, prep):
    T, B = xs.shape[0], xs.shape[1]
    xv = _pack_xv(xs.reshape(T, B, -1).astype(jnp.float32),
                  vs.astype(jnp.float32))                           # (T,B,256) bf16

    def whole(arr):   # full-array block, constant index_map -> DMA'd once
        return pl.BlockSpec(arr.shape, lambda t, _nd=arr.ndim: (0,) * _nd)

    acts, h_fin = pl.pallas_call(
        _rollout_kernel,
        out_shape=(jax.ShapeDtypeStruct((T, B, FC_PAD), jnp.float32),
                   jax.ShapeDtypeStruct((B, HIDDEN), jnp.float32)),
        grid=(T,),
        in_specs=[pl.BlockSpec((1, B, K_PAD), lambda t: (t, 0, 0)),
                  whole(h0),
                  whole(prep["w_in"]), whole(prep["b_v"]),
                  whole(prep["w_i"]), whole(prep["w_h"]),
                  whole(prep["b_rz"]), whole(prep["b_in"]),
                  whole(prep["b_hn"]), whole(prep["w_fc_pad"])],
        out_specs=(pl.BlockSpec((1, B, FC_PAD), lambda t: (t, 0, 0)),
                   pl.BlockSpec((B, HIDDEN), lambda t: (0, 0))),
        input_output_aliases={1: 1},   # h0 buffer reused for final h
        compiler_params=pltpu.CompilerParams(
            dimension_semantics=("arbitrary",)),   # h carried across time
    )(xv, h0,
      prep["w_in"], prep["b_v"], prep["w_i"], prep["w_h"],
      prep["b_rz"], prep["b_in"], prep["b_hn"], prep["w_fc_pad"])
    return acts[:, :, :DIM_ACTION], h_fin


_forward_rollout_jit = jax.jit(_forward_rollout, donate_argnums=(2,))


def model_forward_rollout(xs, vs, h0, prep):
    """T steps in one kernel. xs:(T,B,12,16) vs:(T,B,9) h0:(B,192) or None.
    Returns (acts(T,B,4), h_final(B,192)). NOTE: h0 is donated."""
    if h0 is None:
        h0 = jnp.zeros((xs.shape[1], HIDDEN), jnp.float32)
    return _forward_rollout_jit(xs, vs, h0, prep)


# ----------------------------------------------------------------------------
# Init + references
# ----------------------------------------------------------------------------
def init_params(key):
    """Deterministic init mimicking PyTorch defaults (uniform(-1/sqrt(fan_in)))."""
    ks = jax.random.split(key, 8)

    def unif(k, shape, fan_in):
        bound = 1.0 / jnp.sqrt(fan_in)
        return jax.random.uniform(k, shape, jnp.float32, -bound, bound)

    return {
        "w_stem": unif(ks[0], (HIDDEN, STEM_IN), STEM_IN),       # Linear(192,192,bias=False)
        "w_v": unif(ks[1], (HIDDEN, DIM_OBS), DIM_OBS),          # Linear(9,192)
        "b_v": unif(ks[2], (HIDDEN,), DIM_OBS),
        "w_ih": unif(ks[3], (3 * HIDDEN, HIDDEN), HIDDEN),       # GRUCell(192,192)
        "w_hh": unif(ks[4], (3 * HIDDEN, HIDDEN), HIDDEN),
        "b_ih": unif(ks[5], (3 * HIDDEN,), HIDDEN),
        "b_hh": unif(ks[6], (3 * HIDDEN,), HIDDEN),
        "w_fc": unif(ks[7], (DIM_ACTION, HIDDEN), HIDDEN) * 0.01,  # fc.weight.mul_(0.01)
    }


def reference_forward_fp32(x, v, hx, params):
    """Pure-JAX fp32 reference with exact PyTorch module semantics."""
    B = x.shape[0]
    xf = x.reshape(B, -1)
    if hx is None:
        hx = jnp.zeros((B, HIDDEN), jnp.float32)
    a = _leaky(xf @ params["w_stem"].T + v @ params["w_v"].T + params["b_v"])
    H = HIDDEN
    gi = a @ params["w_ih"].T + params["b_ih"]
    gh = hx @ params["w_hh"].T + params["b_hh"]
    r = jax.nn.sigmoid(gi[:, :H] + gh[:, :H])
    z = jax.nn.sigmoid(gi[:, H:2 * H] + gh[:, H:2 * H])
    n = jnp.tanh(gi[:, 2 * H:] + r * gh[:, 2 * H:])
    h_new = (1.0 - z) * n + z * hx
    out = jnp.tanh(_leaky(h_new) @ params["w_fc"].T)
    return out, h_new


def reference_forward_bf16(x, v, hx, prep):
    """Pure-JAX reference using the exact same packed-weight / bf16-matmul math."""
    B = x.shape[0]
    xv = _pack_xv(x.reshape(B, -1).astype(jnp.float32), v.astype(jnp.float32))
    h = hx if hx is not None else jnp.zeros((B, HIDDEN), jnp.float32)
    h_new, act = _gru_step(xv, h, prep["w_in"], prep["b_v"], prep["w_i"],
                           prep["w_h"], prep["b_rz"], prep["b_in"],
                           prep["b_hn"], prep["w_fc_pad"])
    return act[:, :DIM_ACTION], h_new


# ----------------------------------------------------------------------------
if __name__ == "__main__":
    key = jax.random.PRNGKey(0)
    kp, kx, kv, kh, kxs, kvs = jax.random.split(key, 6)
    params = init_params(kp)
    prep = prepare_params(params)          # one-time weight packing

    B, T = 2, 8
    x = jax.random.normal(kx, (B, 12, 16), jnp.float32)
    v = jax.random.normal(kv, (B, DIM_OBS), jnp.float32)
    hx = jax.random.normal(kh, (B, HIDDEN), jnp.float32)
    xs = jax.random.normal(kxs, (T, B, 12, 16), jnp.float32)
    vs = jax.random.normal(kvs, (T, B, DIM_OBS), jnp.float32)

    # ---- references (computed before kernel calls; kernel donates its hx copy) ----
    ref32_out, ref32_h = reference_forward_fp32(x, v, hx, params)
    ref16_out, ref16_h = reference_forward_bf16(x, v, hx, prep)

    h32, h16 = hx, hx
    ref32_acts, ref16_acts = [], []
    for t in range(T):
        o32, h32 = reference_forward_fp32(xs[t], vs[t], h32, params)
        o16, h16 = reference_forward_bf16(xs[t], vs[t], h16, prep)
        ref32_acts.append(o32)
        ref16_acts.append(o16)
    ref32_acts = jnp.stack(ref32_acts)
    ref16_acts = jnp.stack(ref16_acts)

    # ---- single-step kernel ----
    out, h_new = model_forward(x, v, jnp.copy(hx), prep)
    out, h_new = jax.block_until_ready((out, h_new))
    assert out.shape == (B, DIM_ACTION) and h_new.shape == (B, HIDDEN)
    assert jnp.allclose(out, ref16_out, atol=5e-3, rtol=5e-3)
    assert jnp.allclose(h_new, ref16_h, atol=5e-3, rtol=5e-3)
    assert jnp.allclose(out, ref32_out, atol=5e-2, rtol=5e-2)
    assert jnp.allclose(h_new, ref32_h, atol=5e-2, rtol=5e-2)

    # ---- rollout kernel (time loop inside the kernel, weights resident) ----
    acts, h_fin = model_forward_rollout(xs, vs, jnp.copy(hx), prep)
    acts, h_fin = jax.block_until_ready((acts, h_fin))
    assert acts.shape == (T, B, DIM_ACTION) and h_fin.shape == (B, HIDDEN)
    assert jnp.allclose(acts, ref16_acts, atol=5e-3, rtol=5e-3)
    assert jnp.allclose(h_fin, h16, atol=5e-3, rtol=5e-3)
    assert jnp.allclose(acts, ref32_acts, atol=5e-2, rtol=5e-2)
    assert jnp.allclose(h_fin, h32, atol=5e-2, rtol=5e-2)

    print("KERNEL_OK")
</pallas_src>

<mosaic_0001>
module attributes {stable_mosaic.version = 11 : i64} {
  func.func @_step_kernel(%arg0: memref<2x256xbf16, #tpu.memory_space<vmem>>, %arg1: memref<2x192xf32, #tpu.memory_space<vmem>>, %arg2: memref<256x192xbf16, #tpu.memory_space<vmem>>, %arg3: memref<1x192xf32, #tpu.memory_space<vmem>>, %arg4: memref<192x768xbf16, #tpu.memory_space<vmem>>, %arg5: memref<192x768xbf16, #tpu.memory_space<vmem>>, %arg6: memref<1x512xf32, #tpu.memory_space<vmem>>, %arg7: memref<1x192xf32, #tpu.memory_space<vmem>>, %arg8: memref<1x192xf32, #tpu.memory_space<vmem>>, %arg9: memref<192x128xbf16, #tpu.memory_space<vmem>>, %arg10: memref<2x128xf32, #tpu.memory_space<vmem>>, %arg11: memref<2x192xf32, #tpu.memory_space<vmem>>) attributes {dimension_semantics = [], scalar_prefetch = 0 : i64, scratch_operands = 0 : i64, tpu.core_type = #tpu.core_type<tc>} {
    %c0 = arith.constant 0 : index
    %c0_0 = arith.constant 0 : index
    %0 = vector.load %arg0[%c0, %c0_0] : memref<2x256xbf16, #tpu.memory_space<vmem>>, vector<2x256xbf16>
    %c0_1 = arith.constant 0 : index
    %c0_2 = arith.constant 0 : index
    %1 = vector.load %arg1[%c0_1, %c0_2] : memref<2x192xf32, #tpu.memory_space<vmem>>, vector<2x192xf32>
    %c0_3 = arith.constant 0 : index
    %c0_4 = arith.constant 0 : index
    %2 = vector.load %arg2[%c0_3, %c0_4] : memref<256x192xbf16, #tpu.memory_space<vmem>>, vector<256x192xbf16>
    %c0_5 = arith.constant 0 : index
    %c0_6 = arith.constant 0 : index
    %3 = vector.load %arg3[%c0_5, %c0_6] : memref<1x192xf32, #tpu.memory_space<vmem>>, vector<1x192xf32>
    %c0_7 = arith.constant 0 : index
    %c0_8 = arith.constant 0 : index
    %4 = vector.load %arg4[%c0_7, %c0_8] : memref<192x768xbf16, #tpu.memory_space<vmem>>, vector<192x768xbf16>
    %c0_9 = arith.constant 0 : index
    %c0_10 = arith.constant 0 : index
    %5 = vector.load %arg5[%c0_9, %c0_10] : memref<192x768xbf16, #tpu.memory_space<vmem>>, vector<192x768xbf16>
    %c0_11 = arith.constant 0 : index
    %c0_12 = arith.constant 0 : index
    %6 = vector.load %arg6[%c0_11, %c0_12] : memref<1x512xf32, #tpu.memory_space<vmem>>, vector<1x512xf32>
    %c0_13 = arith.constant 0 : index
    %c0_14 = arith.constant 0 : index
    %7 = vector.load %arg7[%c0_13, %c0_14] : memref<1x192xf32, #tpu.memory_space<vmem>>, vector<1x192xf32>
    %c0_15 = arith.constant 0 : index
    %c0_16 = arith.constant 0 : index
    %8 = vector.load %arg8[%c0_15, %c0_16] : memref<1x192xf32, #tpu.memory_space<vmem>>, vector<1x192xf32>
    %c0_17 = arith.constant 0 : index
    %c0_18 = arith.constant 0 : index
    %9 = vector.load %arg9[%c0_17, %c0_18] : memref<192x128xbf16, #tpu.memory_space<vmem>>, vector<192x128xbf16>
    %cst = arith.constant dense<0.000000e+00> : vector<2x192xf32>
    %10 = tpu.matmul %0, %2, %cst {dimension_numbers = #tpu.dot_dimension_numbers<[1], [0], [0], [1], [0, 0, 1, 1], [], []>} : vector<2x256xbf16>, vector<256x192xbf16>, vector<2x192xf32> -> vector<2x192xf32>
    %11 = vector.broadcast %3 : vector<1x192xf32> to vector<2x192xf32>
    %12 = arith.addf %10, %11 : vector<2x192xf32>
    %cst_19 = arith.constant 0.000000e+00 : f32
    %13 = vector.broadcast %cst_19 : f32 to vector<2x192xf32>
    %14 = arith.cmpf ogt, %12, %13 : vector<2x192xf32>
    %cst_20 = arith.constant 5.000000e-02 : f32
    %15 = vector.broadcast %cst_20 : f32 to vector<2x192xf32>
    %16 = arith.mulf %15, %12 : vector<2x192xf32>
    %17 = arith.select %14, %12, %16 : vector<2x192xi1>, vector<2x192xf32>
    %18 = arith.truncf %17 : vector<2x192xf32> to vector<2x192xbf16>
    %cst_21 = arith.constant dense<0.000000e+00> : vector<2x768xf32>
    %19 = tpu.matmul %18, %4, %cst_21 {dimension_numbers = #tpu.dot_dimension_numbers<[1], [0], [0], [1], [0, 0, 1, 1], [], []>} : vector<2x192xbf16>, vector<192x768xbf16>, vector<2x768xf32> -> vector<2x768xf32>
    %20 = arith.truncf %1 : vector<2x192xf32> to vector<2x192xbf16>
    %cst_22 = arith.constant dense<0.000000e+00> : vector<2x768xf32>
    %21 = tpu.matmul %20, %5, %cst_22 {dimension_numbers = #tpu.dot_dimension_numbers<[1], [0], [0], [1], [0, 0, 1, 1], [], []>} : vector<2x192xbf16>, vector<192x768xbf16>, vector<2x768xf32> -> vector<2x768xf32>
    %22 = vector.extract_strided_slice %19 {offsets = [0, 0], sizes = [2, 512], strides = [1, 1]} : vector<2x768xf32> to vector<2x512xf32>
    %23 = vector.extract_strided_slice %21 {offsets = [0, 0], sizes = [2, 512], strides = [1, 1]} : vector<2x768xf32> to vector<2x512xf32>
    %24 = arith.addf %22, %23 : vector<2x512xf32>
    %25 = vector.broadcast %6 : vector<1x512xf32> to vector<2x512xf32>
    %26 = arith.addf %24, %25 : vector<2x512xf32>
    %27 = arith.negf %26 : vector<2x512xf32>
    %28 = math.exp %27 : vector<2x512xf32>
    %cst_23 = arith.constant 1.000000e+00 : f32
    %29 = vector.broadcast %cst_23 : f32 to vector<2x512xf32>
    %30 = arith.addf %29, %28 : vector<2x512xf32>
    %31 = arith.divf %29, %30 : vector<2x512xf32>
    %32 = vector.extract_strided_slice %31 {offsets = [0, 0], sizes = [2, 192], strides = [1, 1]} : vector<2x512xf32> to vector<2x192xf32>
    %33 = vector.extract_strided_slice %31 {offsets = [0, 256], sizes = [2, 192], strides = [1, 1]} : vector<2x512xf32> to vector<2x192xf32>
    %34 = vector.extract_strided_slice %19 {offsets = [0, 512], sizes = [2, 192], strides = [1, 1]} : vector<2x768xf32> to vector<2x192xf32>
    %35 = vector.broadcast %7 : vector<1x192xf32> to vector<2x192xf32>
    %36 = arith.addf %34, %35 : vector<2x192xf32>
    %37 = vector.extract_strided_slice %21 {offsets = [0, 512], sizes = [2, 192], strides = [1, 1]} : vector<2x768xf32> to vector<2x192xf32>
    %38 = vector.broadcast %8 : vector<1x192xf32> to vector<2x192xf32>
    %39 = arith.addf %37, %38 : vector<2x192xf32>
    %40 = arith.mulf %32, %39 : vector<2x192xf32>
    %41 = arith.addf %36, %40 : vector<2x192xf32>
    %42 = math.tanh %41 : vector<2x192xf32>
    %cst_24 = arith.constant 1.000000e+00 : f32
    %43 = vector.broadcast %cst_24 : f32 to vector<2x192xf32>
    %44 = arith.subf %43, %33 : vector<2x192xf32>
    %45 = arith.mulf %44, %42 : vector<2x192xf32>
    %46 = arith.mulf %33, %1 : vector<2x192xf32>
    %47 = arith.addf %45, %46 : vector<2x192xf32>
    %cst_25 = arith.constant 0.000000e+00 : f32
    %48 = vector.broadcast %cst_25 : f32 to vector<2x192xf32>
    %49 = arith.cmpf ogt, %47, %48 : vector<2x192xf32>
    %cst_26 = arith.constant 5.000000e-02 : f32
    %50 = vector.broadcast %cst_26 : f32 to vector<2x192xf32>
    %51 = arith.mulf %50, %47 : vector<2x192xf32>
    %52 = arith.select %49, %47, %51 : vector<2x192xi1>, vector<2x192xf32>
    %53 = arith.truncf %52 : vector<2x192xf32> to vector<2x192xbf16>
    %cst_27 = arith.constant dense<0.000000e+00> : vector<2x128xf32>
    %54 = tpu.matmul %53, %9, %cst_27 {dimension_numbers = #tpu.dot_dimension_numbers<[1], [0], [0], [1], [0, 0, 1, 1], [], []>} : vector<2x192xbf16>, vector<192x128xbf16>, vector<2x128xf32> -> vector<2x128xf32>
    %55 = math.tanh %54 : vector<2x128xf32>
    %c0_28 = arith.constant 0 : index
    %c0_29 = arith.constant 0 : index
    %56 = vector.load %arg11[%c0_28, %c0_29] : memref<2x192xf32, #tpu.memory_space<vmem>>, vector<2x192xf32>
    tpu.vector_store %arg11[%c0_28, %c0_29], %47 {strides = array<i32>} : memref<2x192xf32, #tpu.memory_space<vmem>>, vector<2x192xf32>,
    %c0_30 = arith.constant 0 : index
    %c0_31 = arith.constant 0 : index
    %57 = vector.load %arg10[%c0_30, %c0_31] : memref<2x128xf32, #tpu.memory_space<vmem>>, vector<2x128xf32>
    tpu.vector_store %arg10[%c0_30, %c0_31], %55 {strides = array<i32>} : memref<2x128xf32, #tpu.memory_space<vmem>>, vector<2x128xf32>,
    return
  }
}

</mosaic_0001>

<llo_original>
// kernel: _forward_step.1
$region0: #{_forward_step.1}
  #allocation0 [shape = 'u32[]', space=smem, size = 0x4, offset = 0x4, fixed_abs, tag = 'smem constant byte address 0x4 - core index']
  #allocation1 [shape = 'u32[144,128]{1,0:T(1,128)}', space=vmem, size = 0x12000, scoped, tag = 'internal scratch']
  %s0 = inlined_call_operand.vmem [shape: bf16[2,256], index: 0, kind: input, shape index: {}]
  %s1 = inlined_call_operand.vmem [shape: f32[2,192], index: 1, kind: input, shape index: {}, may-alias: {1,11}]
  %s2 = inlined_call_operand.vmem [shape: bf16[256,192], index: 2, kind: input, shape index: {}]
  %s3 = inlined_call_operand.vmem [shape: f32[1,192], index: 3, kind: input, shape index: {}]
  %s4 = inlined_call_operand.hbm [shape: bf16[192,768], index: 4, kind: input, shape index: {}]
  %s5 = inlined_call_operand.hbm [shape: bf16[192,768], index: 5, kind: input, shape index: {}]
  %s6 = inlined_call_operand.vmem [shape: f32[1,512], index: 6, kind: input, shape index: {}]
  %s7 = inlined_call_operand.vmem [shape: f32[1,192], index: 7, kind: input, shape index: {}]
  %s8 = inlined_call_operand.vmem [shape: f32[1,192], index: 8, kind: input, shape index: {}]
  %s9 = inlined_call_operand.vmem [shape: bf16[192,128], index: 9, kind: input, shape index: {}]
  %s10 = inlined_call_operand.hbm [shape: f32[2,128], index: 10, kind: output, shape index: {0}]
  %s11 = inlined_call_operand.vmem [shape: f32[2,192], index: 11, kind: output, shape index: {1}, may-alias: {1,11}]
  %12 = xla_tuple %s10, %s11
  %s13 = sld [smem:[#allocation0]]
  $region66: #{_forward_step.1} parent=0
    _
  %s15 = ssub.s32 1, %s13
  %s16 = scalar_select 0, %s15, %s13
  $region1: #{_forward_step.1} parent=0
    #allocation2 [shape = 'u8[294912]{0}', space=vmem, size = 0x48000, scoped, tag = 'input window, operand 4, single buffered']
    #allocation3 [shape = 's32[1]{0}', space=sflag, size = 0x4, scoped, tag = 'scoped memory for _forward_step.1']
    #allocation4 [shape = 's32[1]{0}', space=sflag, size = 0x4, scoped, tag = 'scoped memory for _forward_step.1']
    #allocation5 [shape = 'u8[294912]{0}', space=vmem, size = 0x48000, scoped, tag = 'input window, operand 5, single buffered']
    #allocation6 [shape = 's32[1]{0}', space=sflag, size = 0x4, scoped, tag = 'scoped memory for _forward_step.1']
    #allocation7 [shape = 'u8[1024]{0}', space=vmem, size = 0x400, scoped, tag = 'output window, operand 0, single buffered']
    %17 = vsyncpa [#allocation3], 0
    %18 = vsyncpa [#allocation6], 0
    %19 = vsyncpa [#allocation4], 0
    // Predicated region
    $region2: #{_forward_step.1} parent=1 // pred_check
      _
    $region3: #{_forward_step.1} parent=1 // pred_check_branch
      %21 = sbr.rel (0) target = $region5
    $region4: #{_forward_step.1} parent=1 // pred_region
      _
    $region5: #{_forward_step.1} parent=1 // pred_fallthru
      _
    // Predicated region
    $region6: #{_forward_step.1} parent=1 // pred_check
      _
    $region7: #{_forward_step.1} parent=1 // pred_check_branch
      %23 = sbr.rel (0) target = $region9
    $region8: #{_forward_step.1} parent=1 // pred_region
      _
    $region9: #{_forward_step.1} parent=1 // pred_fallthru
      _
    // Predicated region
    $region10: #{_forward_step.1} parent=1 // pred_check
      _
    $region11: #{_forward_step.1} parent=1 // pred_check_branch
      %25 = sbr.rel (0) target = $region13
    $region12: #{_forward_step.1} parent=1 // pred_region
      _
    $region13: #{_forward_step.1} parent=1 // pred_fallthru
      _
    // Predicated region
    $region14: #{_forward_step.1} parent=1 // pred_check
      _
    $region15: #{_forward_step.1} parent=1 // pred_check_branch
      %27 = sbr.rel (0) target = $region17
    $region16: #{_forward_step.1} parent=1 // pred_region
      _
    $region17: #{_forward_step.1} parent=1 // pred_fallthru
      _
    // Predicated region
    $region18: #{_forward_step.1} parent=1 // pred_check
      _
    $region19: #{_forward_step.1} parent=1 // pred_check_branch
      %29 = sbr.rel (0) target = $region21
    $region20: #{_forward_step.1} parent=1 // pred_region
      %s31 = ssub.s32 9216, 9216
      %32 = vsyncadd [#allocation3], %s31
      %s33 = sshll.u32 [#allocation2], 4
      %s34 = int_to_ptr.vmem [resolvable:$true] %s33
      %39 = dma.hbm_to_vmem [thread:$0]  %s4, 9216, %s34, [#allocation3], 384, 384, 24
    $region21: #{_forward_step.1} parent=1 // pred_fallthru
      _
    // Predicated region
    $region22: #{_forward_step.1} parent=1 // pred_check
      _
    $region23: #{_forward_step.1} parent=1 // pred_check_branch
      %41 = sbr.rel (0) target = $region25
    $region24: #{_forward_step.1} parent=1 // pred_region
      %s43 = ssub.s32 9216, 9216
      %44 = vsyncadd [#allocation6], %s43
      %s45 = sshll.u32 [#allocation5], 4
      %s46 = int_to_ptr.vmem [resolvable:$true] %s45
      %51 = dma.hbm_to_vmem [thread:$0]  %s5, 9216, %s46, [#allocation6], 384, 384, 24
    $region25: #{_forward_step.1} parent=1 // pred_fallthru
      _
    // Predicated region
    $region26: #{_forward_step.1} parent=1 // pred_check
      _
    $region27: #{_forward_step.1} parent=1 // pred_check_branch
      %53 = sbr.rel (0) target = $region29
    $region28: #{_forward_step.1} parent=1 // pred_region
      _
    $region29: #{_forward_step.1} parent=1 // pred_fallthru
      _
    // Predicated region
    $region30: #{_forward_step.1} parent=1 // pred_check
      _
    $region31: #{_forward_step.1} parent=1 // pred_check_branch
      %55 = sbr.rel (0) target = $region33
    $region32: #{_forward_step.1} parent=1 // pred_region
      _
    $region33: #{_forward_step.1} parent=1 // pred_fallthru
      _
    // Predicated region
    $region34: #{_forward_step.1} parent=1 // pred_check
      _
    $region35: #{_forward_step.1} parent=1 // pred_check_branch
      %57 = sbr.rel (0) target = $region37
    $region36: #{_forward_step.1} parent=1 // pred_region
      _
    $region37: #{_forward_step.1} parent=1 // pred_fallthru
      _
    // Predicated region
    $region38: #{_forward_step.1} parent=1 // pred_check
      _
    $region39: #{_forward_step.1} parent=1 // pred_check_branch
      %59 = sbr.rel (0) target = $region41
    $region40: #{_forward_step.1} parent=1 // pred_region
      _
    $region41: #{_forward_step.1} parent=1 // pred_fallthru
      _
    // Predicated region
    $region42: #{_forward_step.1} parent=1 // pred_check
      _
    $region43: #{_forward_step.1} parent=1 // pred_check_branch
      %61 = sbr.rel (0) target = $region45
    $region44: #{_forward_step.1} parent=1 // pred_region
      %62 = dma.done [#allocation3], 9216
    $region45: #{_forward_step.1} parent=1 // pred_fallthru
      _
    // Predicated region
    $region46: #{_forward_step.1} parent=1 // pred_check
      _
    $region47: #{_forward_step.1} parent=1 // pred_check_branch
      %64 = sbr.rel (0) target = $region49
    $region48: #{_forward_step.1} parent=1 // pred_region
      %65 = dma.done [#allocation6], 9216
    $region49: #{_forward_step.1} parent=1 // pred_fallthru
      _
    %v67 = vld [vmem:[%s0] sm:$0x3]
    %v68 = vld [vmem:[%s1] sm:$0xf]
    %v69 = vld [vmem:[%s2] sm:$0xff]
    %v70 = vld [vmem:[%s2 + $0x8] sm:$0xff]
    %v71 = vld [vmem:[%s2 + $0x10] sm:$0xff]
    %v72 = vld [vmem:[%s2 + $0x18] sm:$0xff]
    %v73 = vld [vmem:[%s2 + $0x20] sm:$0xff]
    %v74 = vld [vmem:[%s2 + $0x28] sm:$0xff]
    %v75 = vld [vmem:[%s2 + $0x30] sm:$0xff]
    %v76 = vld [vmem:[%s2 + $0x38] sm:$0xff]
    %v77 = vld [vmem:[%s2 + $0x40] sm:$0xff]
    %v78 = vld [vmem:[%s2 + $0x48] sm:$0xff]
    %v79 = vld [vmem:[%s2 + $0x50] sm:$0xff]
    %v80 = vld [vmem:[%s2 + $0x58] sm:$0xff]
    %v81 = vld [vmem:[%s2 + $0x60] sm:$0xff]
    %v82 = vld [vmem:[%s2 + $0x68] sm:$0xff]
    %v83 = vld [vmem:[%s2 + $0x70] sm:$0xff]
    %v84 = vld [vmem:[%s2 + $0x78] sm:$0xff]
    %v85 = vld [vmem:[%s2 + $0x80] sm:$0xff]
    %v86 = vld [vmem:[%s2 + $0x88] sm:$0xff]
    %v87 = vld [vmem:[%s2 + $0x90] sm:$0xff]
    %v88 = vld [vmem:[%s2 + $0x98] sm:$0xff]
    %v89 = vld [vmem:[%s2 + $0xa0] sm:$0xff]
    %v90 = vld [vmem:[%s2 + $0xa8] sm:$0xff]
    %v91 = vld [vmem:[%s2 + $0xb0] sm:$0xff]
    %v92 = vld [vmem:[%s2 + $0xb8] sm:$0xff]
    %v93 = vld [vmem:[%s2 + $0xc0] sm:$0xff]
    %v94 = vld [vmem:[%s2 + $0xc8] sm:$0xff]
    %v95 = vld [vmem:[%s2 + $0xd0] sm:$0xff]
    %v96 = vld [vmem:[%s2 + $0xd8] sm:$0xff]
    %v97 = vld [vmem:[%s2 + $0xe0] sm:$0xff]
    %v98 = vld [vmem:[%s2 + $0xe8] sm:$0xff]
    %v99 = vld [vmem:[%s2 + $0xf0] sm:$0xff]
    %v100 = vld [vmem:[%s2 + $0xf8] sm:$0xff]
    %v101 = vld [vmem:[%s3] sm:$0x3]
    %v102 = vld [vmem:[#allocation2] sm:$0xff]
    %v103 = vld [vmem:[#allocation2 + $0x8] sm:$0xff]
    %v104 = vld [vmem:[#allocation2 + $0x10] sm:$0xff]
    %v105 = vld [vmem:[#allocation2 + $0x18] sm:$0xff]
    %v106 = vld [vmem:[#allocation2 + $0x20] sm:$0xff]
    %v107 = vld [vmem:[#allocation2 + $0x28] sm:$0xff]
    %v108 = vld [vmem:[#allocation2 + $0x30] sm:$0xff]
    %v109 = vld [vmem:[#allocation2 + $0x38] sm:$0xff]
    %v110 = vld [vmem:[#allocation2 + $0x40] sm:$0xff]
    %v111 = vld [vmem:[#allocation2 + $0x48] sm:$0xff]
    %v112 = vld [vmem:[#allocation2 + $0x50] sm:$0xff]
    %v113 = vld [vmem:[#allocation2 + $0x58] sm:$0xff]
    %v114 = vld [vmem:[#allocation2 + $0x60] sm:$0xff]
    %v115 = vld [vmem:[#allocation2 + $0x68] sm:$0xff]
    %v116 = vld [vmem:[#allocation2 + $0x70] sm:$0xff]
    %v117 = vld [vmem:[#allocation2 + $0x78] sm:$0xff]
    %v118 = vld [vmem:[#allocation2 + $0x80] sm:$0xff]
    %v119 = vld [vmem:[#allocation2 + $0x88] sm:$0xff]
    %v120 = vld [vmem:[#allocation2 + $0x90] sm:$0xff]
    %v121 = vld [vmem:[#allocation2 + $0x98] sm:$0xff]
    %v122 = vld [vmem:[#allocation2 + $0xa0] sm:$0xff]
    %v123 = vld [vmem:[#allocation2 + $0xa8] sm:$0xff]
    %v124 = vld [vmem:[#allocation2 + $0xb0] sm:$0xff]
    %v125 = vld [vmem:[#allocation2 + $0xb8] sm:$0xff]
    %v126 = vld [vmem:[#allocation2 + $0xc0] sm:$0xff]
    %v127 = vld [vmem:[#allocation2 + $0xc8] sm:$0xff]
    %v128 = vld [vmem:[#allocation2 + $0xd0] sm:$0xff]
    %v129 = vld [vmem:[#allocation2 + $0xd8] sm:$0xff]
    %v130 = vld [vmem:[#allocation2 + $0xe0] sm:$0xff]
    %v131 = vld [vmem:[#allocation2 + $0xe8] sm:$0xff]
    %v132 = vld [vmem:[#allocation2 + $0xf0] sm:$0xff]
    %v133 = vld [vmem:[#allocation2 + $0xf8] sm:$0xff]
    %v134 = vld [vmem:[#allocation2 + $0x100] sm:$0xff]
    %v135 = vld [vmem:[#allocation2 + $0x108] sm:$0xff]
    %v136 = vld [vmem:[#allocation2 + $0x110] sm:$0xff]
    %v137 = vld [vmem:[#allocation2 + $0x118] sm:$0xff]
    %v138 = vld [vmem:[#allocation2 + $0x120] sm:$0xff]
    %v139 = vld [vmem:[#allocation2 + $0x128] sm:$0xff]
    %v140 = vld [vmem:[#allocation2 + $0x130] sm:$0xff]
    %v141 = vld [vmem:[#allocation2 + $0x138] sm:$0xff]
    %v142 = vld [vmem:[#allocation2 + $0x140] sm:$0xff]
    %v143 = vld [vmem:[#allocation2 + $0x148] sm:$0xff]
    %v144 = vld [vmem:[#allocation2 + $0x150] sm:$0xff]
    %v145 = vld [vmem:[#allocation2 + $0x158] sm:$0xff]
    %v146 = vld [vmem:[#allocation2 + $0x160] sm:$0xff]
    %v147 = vld [vmem:[#allocation2 + $0x168] sm:$0xff]
    %v148 = vld [vmem:[#allocation2 + $0x170] sm:$0xff]
    %v149 = vld [vmem:[#allocation2 + $0x178] sm:$0xff]
    %v150 = vld [vmem:[#allocation2 + $0x180] sm:$0xff]
    %v151 = vld [vmem:[#allocation2 + $0x188] sm:$0xff]
    %v152 = vld [vmem:[#allocation2 + $0x190] sm:$0xff]
    %v153 = vld [vmem:[#allocation2 + $0x198] sm:$0xff]
    %v154 = vld [vmem:[#allocation2 + $0x1a0] sm:$0xff]
    %v155 = vld [vmem:[#allocation2 + $0x1a8] sm:$0xff]
    %v156 = vld [vmem:[#allocation2 + $0x1b0] sm:$0xff]
    %v157 = vld [vmem:[#allocation2 + $0x1b8] sm:$0xff]
    %v158 = vld [vmem:[#allocation2 + $0x1c0] sm:$0xff]
    %v159 = vld [vmem:[#allocation2 + $0x1c8] sm:$0xff]
    %v160 = vld [vmem:[#allocation2 + $0x1d0] sm:$0xff]
    %v161 = vld [vmem:[#allocation2 + $0x1d8] sm:$0xff]
    %v162 = vld [vmem:[#allocation2 + $0x1e0] sm:$0xff]
    %v163 = vld [vmem:[#allocation2 + $0x1e8] sm:$0xff]
    %v164 = vld [vmem:[#allocation2 + $0x1f0] sm:$0xff]
    %v165 = vld [vmem:[#allocation2 + $0x1f8] sm:$0xff]
    %v166 = vld [vmem:[#allocation2 + $0x200] sm:$0xff]
    %v167 = vld [vmem:[#allocation2 + $0x208] sm:$0xff]
    %v168 = vld [vmem:[#allocation2 + $0x210] sm:$0xff]
    %v169 = vld [vmem:[#allocation2 + $0x218] sm:$0xff]
    %v170 = vld [vmem:[#allocation2 + $0x220] sm:$0xff]
    %v171 = vld [vmem:[#allocation2 + $0x228] sm:$0xff]
    %v172 = vld [vmem:[#allocation2 + $0x230] sm:$0xff]
    %v173 = vld [vmem:[#allocation2 + $0x238] sm:$0xff]
    %v174 = vld [vmem:[#allocation5] sm:$0xff]
    %v175 = vld [vmem:[#allocation5 + $0x8] sm:$0xff]
    %v176 = vld [vmem:[#allocation5 + $0x10] sm:$0xff]
    %v177 = vld [vmem:[#allocation5 + $0x18] sm:$0xff]
    %v178 = vld [vmem:[#allocation5 + $0x20] sm:$0xff]
    %v179 = vld [vmem:[#allocation5 + $0x28] sm:$0xff]
    %v180 = vld [vmem:[#allocation5 + $0x30] sm:$0xff]
    %v181 = vld [vmem:[#allocation5 + $0x38] sm:$0xff]
    %v182 = vld [vmem:[#allocation5 + $0x40] sm:$0xff]
    %v183 = vld [vmem:[#allocation5 + $0x48] sm:$0xff]
    %v184 = vld [vmem:[#allocation5 + $0x50] sm:$0xff]
    %v185 = vld [vmem:[#allocation5 + $0x58] sm:$0xff]
    %v186 = vld [vmem:[#allocation5 + $0x60] sm:$0xff]
    %v187 = vld [vmem:[#allocation5 + $0x68] sm:$0xff]
    %v188 = vld [vmem:[#allocation5 + $0x70] sm:$0xff]
    %v189 = vld [vmem:[#allocation5 + $0x78] sm:$0xff]
    %v190 = vld [vmem:[#allocation5 + $0x80] sm:$0xff]
    %v191 = vld [vmem:[#allocation5 + $0x88] sm:$0xff]
    %v192 = vld [vmem:[#allocation5 + $0x90] sm:$0xff]
    %v193 = vld [vmem:[#allocation5 + $0x98] sm:$0xff]
    %v194 = vld [vmem:[#allocation5 + $0xa0] sm:$0xff]
    %v195 = vld [vmem:[#allocation5 + $0xa8] sm:$0xff]
    %v196 = vld [vmem:[#allocation5 + $0xb0] sm:$0xff]
    %v197 = vld [vmem:[#allocation5 + $0xb8] sm:$0xff]
    %v198 = vld [vmem:[#allocation5 + $0xc0] sm:$0xff]
    %v199 = vld [vmem:[#allocation5 + $0xc8] sm:$0xff]
    %v200 = vld [vmem:[#allocation5 + $0xd0] sm:$0xff]
    %v201 = vld [vmem:[#allocation5 + $0xd8] sm:$0xff]
    %v202 = vld [vmem:[#allocation5 + $0xe0] sm:$0xff]
    %v203 = vld [vmem:[#allocation5 + $0xe8] sm:$0xff]
    %v204 = vld [vmem:[#allocation5 + $0xf0] sm:$0xff]
    %v205 = vld [vmem:[#allocation5 + $0xf8] sm:$0xff]
    %v206 = vld [vmem:[#allocation5 + $0x100] sm:$0xff]
    %v207 = vld [vmem:[#allocation5 + $0x108] sm:$0xff]
    %v208 = vld [vmem:[#allocation5 + $0x110] sm:$0xff]
    %v209 = vld [vmem:[#allocation5 + $0x118] sm:$0xff]
    %v210 = vld [vmem:[#allocation5 + $0x120] sm:$0xff]
    %v211 = vld [vmem:[#allocation5 + $0x128] sm:$0xff]
    %v212 = vld [vmem:[#allocation5 + $0x130] sm:$0xff]
    %v213 = vld [vmem:[#allocation5 + $0x138] sm:$0xff]
    %v214 = vld [vmem:[#allocation5 + $0x140] sm:$0xff]
    %v215 = vld [vmem:[#allocation5 + $0x148] sm:$0xff]
    %v216 = vld [vmem:[#allocation5 + $0x150] sm:$0xff]
    %v217 = vld [vmem:[#allocation5 + $0x158] sm:$0xff]
    %v218 = vld [vmem:[#allocation5 + $0x160] sm:$0xff]
    %v219 = vld [vmem:[#allocation5 + $0x168] sm:$0xff]
    %v220 = vld [vmem:[#allocation5 + $0x170] sm:$0xff]
    %v221 = vld [vmem:[#allocation5 + $0x178] sm:$0xff]
    %v222 = vld [vmem:[#allocation5 + $0x180] sm:$0xff]
    %v223 = vld [vmem:[#allocation5 + $0x188] sm:$0xff]
    %v224 = vld [vmem:[#allocation5 + $0x190] sm:$0xff]
    %v225 = vld [vmem:[#allocation5 + $0x198] sm:$0xff]
    %v226 = vld [vmem:[#allocation5 + $0x1a0] sm:$0xff]
    %v227 = vld [vmem:[#allocation5 + $0x1a8] sm:$0xff]
    %v228 = vld [vmem:[#allocation5 + $0x1b0] sm:$0xff]
    %v229 = vld [vmem:[#allocation5 + $0x1b8] sm:$0xff]
    %v230 = vld [vmem:[#allocation5 + $0x1c0] sm:$0xff]
    %v231 = vld [vmem:[#allocation5 + $0x1c8] sm:$0xff]
    %v232 = vld [vmem:[#allocation5 + $0x1d0] sm:$0xff]
    %v233 = vld [vmem:[#allocation5 + $0x1d8] sm:$0xff]
    %v234 = vld [vmem:[#allocation5 + $0x1e0] sm:$0xff]
    %v235 = vld [vmem:[#allocation5 + $0x1e8] sm:$0xff]
    %v236 = vld [vmem:[#allocation5 + $0x1f0] sm:$0xff]
    %v237 = vld [vmem:[#allocation5 + $0x1f8] sm:$0xff]
    %v238 = vld [vmem:[#allocation5 + $0x200] sm:$0xff]
    %v239 = vld [vmem:[#allocation5 + $0x208] sm:$0xff]
    %v240 = vld [vmem:[#allocation5 + $0x210] sm:$0xff]
    %v241 = vld [vmem:[#allocation5 + $0x218] sm:$0xff]
    %v242 = vld [vmem:[#allocation5 + $0x220] sm:$0xff]
    %v243 = vld [vmem:[#allocation5 + $0x228] sm:$0xff]
    %v244 = vld [vmem:[#allocation5 + $0x230] sm:$0xff]
    %v245 = vld [vmem:[#allocation5 + $0x238] sm:$0xff]
    %v246 = vld [vmem:[%s6] sm:$0xf]
    %v247 = vld [vmem:[%s7] sm:$0x3]
    %v248 = vld [vmem:[%s8] sm:$0x3]
    %v249 = vld [vmem:[%s9] sm:$0xf]
    %v250 = vld [vmem:[%s9 + $0x4] sm:$0xf]
    %v251 = vld [vmem:[%s9 + $0x8] sm:$0xf]
    %v252 = vld [vmem:[%s9 + $0xc] sm:$0xf]
    %v253 = vld [vmem:[%s9 + $0x10] sm:$0xf]
    %v254 = vld [vmem:[%s9 + $0x14] sm:$0xf]
    %v255 = vld [vmem:[%s9 + $0x18] sm:$0xf]
    %v256 = vld [vmem:[%s9 + $0x1c] sm:$0xf]
    %v257 = vld [vmem:[%s9 + $0x20] sm:$0xf]
    %v258 = vld [vmem:[%s9 + $0x24] sm:$0xf]
    %v259 = vld [vmem:[%s9 + $0x28] sm:$0xf]
    %v260 = vld [vmem:[%s9 + $0x2c] sm:$0xf]
    %v261 = vld [vmem:[%s9 + $0x30] sm:$0xf]
    %v262 = vld [vmem:[%s9 + $0x34] sm:$0xf]
    %v263 = vld [vmem:[%s9 + $0x38] sm:$0xf]
    %v264 = vld [vmem:[%s9 + $0x3c] sm:$0xf]
    %v265 = vld [vmem:[%s9 + $0x40] sm:$0xf]
    %v266 = vld [vmem:[%s9 + $0x44] sm:$0xf]
    %v267 = vld [vmem:[%s9 + $0x48] sm:$0xf]
    %v268 = vld [vmem:[%s9 + $0x4c] sm:$0xf]
    %v269 = vld [vmem:[%s9 + $0x50] sm:$0xf]
    %v270 = vld [vmem:[%s9 + $0x54] sm:$0xf]
    %v271 = vld [vmem:[%s9 + $0x58] sm:$0xf]
    %v272 = vld [vmem:[%s9 + $0x5c] sm:$0xf]
    %v274 = vlaneseq
    %v275 = vshrl.u32 %v274, 7
    %v276 = vsub.s32 0, %v275
    %v277 = vrot.slane %v101, %v276
    %v278 = vlaneseq
    %v279 = vshrl.u32 %v278, 7
    %v280 = vsub.s32 1, %v279
    %v281 = vrot.slane %v101, %v280
    %v286 = vunpack.c.l.s4 1966171168
    %v287 = vunpack.c.0.s8 %v286
    %v288 = vlaneseq
    %v289 = vshrl.u32 %v288, 7
    %v290 = vsub.s32 %v287, %v289
    %v291 = vrot.slane %v67, %v290
    %v292 = vcombine.high %v291, %v291
    %v294 = vunpack.c.l.s4 1966171168
    %v295 = vunpack.c.0.s8 %v294
    %v296 = vlaneseq
    %v297 = vshrl.u32 %v296, 7
    %v298 = vsub.s32 %v295, %v297
    %v299 = vrot.slane %v291, %v298
    %v301 = vunpack.c.l.s4 1966171168
    %v302 = vunpack.c.0.s8 %v301
    %v303 = vlaneseq
    %v304 = vshrl.u32 %v303, 7
    %v305 = vsub.s32 %v302, %v304
    %v306 = vrot.slane %v292, %v305
    %v341 = vunpack.c.l.b16 %v69
    %v342 = vunpack.c.h.b16 %v69
    %v343 = vunpack.c.l.b16 %v70
    %v344 = vunpack.c.h.b16 %v70
    %v345 = vunpack.c.l.b16 %v71
    %v346 = vunpack.c.h.b16 %v71
    %v347 = vunpack.c.l.b16 %v72
    %v348 = vunpack.c.h.b16 %v72
    %v349 = vunpack.c.l.b16 %v73
    %v350 = vunpack.c.h.b16 %v73
    %v351 = vunpack.c.l.b16 %v74
    %v352 = vunpack.c.h.b16 %v74
    %v353 = vunpack.c.l.b16 %v75
    %v354 = vunpack.c.h.b16 %v75
    %v355 = vunpack.c.l.b16 %v76
    %v356 = vunpack.c.h.b16 %v76
    %v357 = vunpack.c.l.b16 %v77
    %v358 = vunpack.c.h.b16 %v77
    %v359 = vunpack.c.l.b16 %v78
    %v360 = vunpack.c.h.b16 %v78
    %v361 = vunpack.c.l.b16 %v79
    %v362 = vunpack.c.h.b16 %v79
    %v363 = vunpack.c.l.b16 %v80
    %v364 = vunpack.c.h.b16 %v80
    %v365 = vunpack.c.l.b16 %v81
    %v366 = vunpack.c.h.b16 %v81
    %v367 = vunpack.c.l.b16 %v82
    %v368 = vunpack.c.h.b16 %v82
    %v369 = vunpack.c.l.b16 %v83
    %v370 = vunpack.c.h.b16 %v83
    %v371 = vunpack.c.l.b16 %v84
    %v372 = vunpack.c.h.b16 %v84
    %v373 = vunpack.c.l.b16 %v85
    %v374 = vunpack.c.h.b16 %v85
    %v375 = vunpack.c.l.b16 %v86
    %v376 = vunpack.c.h.b16 %v86
    %v377 = vunpack.c.l.b16 %v87
    %v378 = vunpack.c.h.b16 %v87
    %v379 = vunpack.c.l.b16 %v88
    %v380 = vunpack.c.h.b16 %v88
    %v381 = vunpack.c.l.b16 %v89
    %v382 = vunpack.c.h.b16 %v89
    %v383 = vunpack.c.l.b16 %v90
    %v384 = vunpack.c.h.b16 %v90
    %v385 = vunpack.c.l.b16 %v91
    %v386 = vunpack.c.h.b16 %v91
    %v387 = vunpack.c.l.b16 %v92
    %v388 = vunpack.c.h.b16 %v92
    %v389 = vunpack.c.l.b16 %v93
    %v390 = vunpack.c.h.b16 %v93
    %v391 = vunpack.c.l.b16 %v94
    %v392 = vunpack.c.h.b16 %v94
    %v393 = vunpack.c.l.b16 %v95
    %v394 = vunpack.c.h.b16 %v95
    %v395 = vunpack.c.l.b16 %v96
    %v396 = vunpack.c.h.b16 %v96
    %v397 = vunpack.c.l.b16 %v97
    %v398 = vunpack.c.h.b16 %v97
    %v399 = vunpack.c.l.b16 %v98
    %v400 = vunpack.c.h.b16 %v98
    %v401 = vunpack.c.l.b16 %v99
    %v402 = vunpack.c.h.b16 %v99
    %v403 = vunpack.c.l.b16 %v100
    %v404 = vunpack.c.h.b16 %v100
    %v405 = vpack.c.b16 %v343, %v341
    %v406 = vpack.c.b16 %v344, %v342
    %v407 = vpack.c.b16 %v347, %v345
    %v408 = vpack.c.b16 %v348, %v346
    %v409 = vpack.c.b16 %v351, %v349
    %v410 = vpack.c.b16 %v352, %v350
    %v411 = vpack.c.b16 %v355, %v353
    %v412 = vpack.c.b16 %v356, %v354
    %v413 = vpack.c.b16 %v359, %v357
    %v414 = vpack.c.b16 %v360, %v358
    %v415 = vpack.c.b16 %v363, %v361
    %v416 = vpack.c.b16 %v364, %v362
    %v417 = vpack.c.b16 %v367, %v365
    %v418 = vpack.c.b16 %v368, %v366
    %v419 = vpack.c.b16 %v371, %v369
    %v420 = vpack.c.b16 %v372, %v370
    %v421 = vpack.c.b16 %v375, %v373
    %v422 = vpack.c.b16 %v376, %v374
    %v423 = vpack.c.b16 %v379, %v377
    %v424 = vpack.c.b16 %v380, %v378
    %v425 = vpack.c.b16 %v383, %v381
    %v426 = vpack.c.b16 %v384, %v382
    %v427 = vpack.c.b16 %v387, %v385
    %v428 = vpack.c.b16 %v388, %v386
    %v429 = vpack.c.b16 %v391, %v389
    %v430 = vpack.c.b16 %v392, %v390
    %v431 = vpack.c.b16 %v395, %v393
    %v432 = vpack.c.b16 %v396, %v394
    %v433 = vpack.c.b16 %v399, %v397
    %v434 = vpack.c.b16 %v400, %v398
    %v435 = vpack.c.b16 %v403, %v401
    %v436 = vpack.c.b16 %v404, %v402
    %469 = vmatprep.subr.bf16.mxu0 %v420
    %470 = vmatpush1.bf16.msra.mxu0 %v419
    %471 = vmatprep.subr.bf16.mxu0 %v418
    %472 = vmatpush1.bf16.msra.mxu0 %v417
    %473 = vmatprep.subr.bf16.mxu0 %v416
    %474 = vmatpush1.bf16.msra.mxu0 %v415
    %475 = vmatprep.subr.bf16.mxu0 %v414
    %476 = vmatpush1.bf16.msra.mxu0 %v413
    %477 = vmatprep.subr.bf16.mxu0 %v412
    %478 = vmatpush1.bf16.msra.mxu0 %v411
    %479 = vmatprep.subr.bf16.mxu0 %v410
    %480 = vmatpush1.bf16.msra.mxu0 %v409
    %481 = vmatprep.subr.bf16.mxu0 %v408
    %482 = vmatpush1.bf16.msra.mxu0 %v407
    %483 = vmatprep.subr.bf16.mxu0 %v406
    %484 = vmatpush1.bf16.msra.mxu0 %v405
    %485 = vmatprep.subr.bf16.mxu0 %v436
    %486 = vmatpush2.bf16.msra.mxu0 %v435
    %487 = vmatprep.subr.bf16.mxu0 %v434
    %488 = vmatpush2.bf16.msra.mxu0 %v433
    %489 = vmatprep.subr.bf16.mxu0 %v432
    %490 = vmatpush2.bf16.msra.mxu0 %v431
    %491 = vmatprep.subr.bf16.mxu0 %v430
    %492 = vmatpush2.bf16.msra.mxu0 %v429
    %493 = vmatprep.subr.bf16.mxu0 %v428
    %494 = vmatpush2.bf16.msra.mxu0 %v427
    %495 = vmatprep.subr.bf16.mxu0 %v426
    %496 = vmatpush2.bf16.msra.mxu0 %v425
    %497 = vmatprep.subr.bf16.mxu0 %v424
    %498 = vmatpush2.bf16.msra.mxu0 %v423
    %499 = vmatprep.subr.bf16.mxu0 %v422
    %500 = vmatpush2.bf16.msra.mxu0 %v421
    %501 = vmatprep.mubr.bf16.mxu0 %v306
    %502 = vmatmul.mubr.bf16.gmra.mxu0 %v299
    %v503 = vpop.f32.mrf.mxu0
    %v504 = vadd.f32 %v277, %v503
    %v505 = vpop.f32.mrf.mxu0
    %v506 = vadd.f32 %v281, %v505
    %v507 = vpop.f32.mrf.mxu0
    %v508 = vpop.f32.mrf.mxu0
    %509 = vdwg.mxu0
    %vm510 = vcmp.gt.f32.partialorder %v504, 0.0
    %vm511 = vcmp.gt.f32.partialorder %v506, 0.0
    %v512 = vmul.f32 %v504, 0.05
    %v513 = vmul.f32 %v506, 0.05
    %v514 = vsel %vm510, %v504, %v512
    %v515 = vsel %vm511, %v506, %v513
    %v516 = vpack.c.bf16 %v514, %v514
    %v517 = vpack.c.bf16 %v515, %v515
    %v590 = vunpack.c.l.b16 %v102
    %v591 = vunpack.c.h.b16 %v102
    %v592 = vunpack.c.l.b16 %v103
    %v593 = vunpack.c.h.b16 %v103
    %v594 = vunpack.c.l.b16 %v104
    %v595 = vunpack.c.h.b16 %v104
    %v596 = vunpack.c.l.b16 %v105
    %v597 = vunpack.c.h.b16 %v105
    %v598 = vunpack.c.l.b16 %v106
    %v599 = vunpack.c.h.b16 %v106
    %v600 = vunpack.c.l.b16 %v107
    %v601 = vunpack.c.h.b16 %v107
    %v602 = vunpack.c.l.b16 %v108
    %v603 = vunpack.c.h.b16 %v108
    %v604 = vunpack.c.l.b16 %v109
    %v605 = vunpack.c.h.b16 %v109
    %v606 = vunpack.c.l.b16 %v110
    %v607 = vunpack.c.h.b16 %v110
    %v608 = vunpack.c.l.b16 %v111
    %v609 = vunpack.c.h.b16 %v111
    %v610 = vunpack.c.l.b16 %v112
    %v611 = vunpack.c.h.b16 %v112
    %v612 = vunpack.c.l.b16 %v113
    %v613 = vunpack.c.h.b16 %v113
    %v614 = vunpack.c.l.b16 %v114
    %v615 = vunpack.c.h.b16 %v114
    %v616 = vunpack.c.l.b16 %v115
    %v617 = vunpack.c.h.b16 %v115
    %v618 = vunpack.c.l.b16 %v116
    %v619 = vunpack.c.h.b16 %v116
    %v620 = vunpack.c.l.b16 %v117
    %v621 = vunpack.c.h.b16 %v117
    %v622 = vunpack.c.l.b16 %v118
    %v623 = vunpack.c.h.b16 %v118
    %v624 = vunpack.c.l.b16 %v119
    %v625 = vunpack.c.h.b16 %v119
    %v626 = vunpack.c.l.b16 %v120
    %v627 = vunpack.c.h.b16 %v120
    %v628 = vunpack.c.l.b16 %v121
    %v629 = vunpack.c.h.b16 %v121
    %v630 = vunpack.c.l.b16 %v122
    %v631 = vunpack.c.h.b16 %v122
    %v632 = vunpack.c.l.b16 %v123
    %v633 = vunpack.c.h.b16 %v123
    %v634 = vunpack.c.l.b16 %v124
    %v635 = vunpack.c.h.b16 %v124
    %v636 = vunpack.c.l.b16 %v125
    %v637 = vunpack.c.h.b16 %v125
    %v638 = vunpack.c.l.b16 %v126
    %v639 = vunpack.c.h.b16 %v126
    %v640 = vunpack.c.l.b16 %v127
    %v641 = vunpack.c.h.b16 %v127
    %v642 = vunpack.c.l.b16 %v128
    %v643 = vunpack.c.h.b16 %v128
    %v644 = vunpack.c.l.b16 %v129
    %v645 = vunpack.c.h.b16 %v129
    %v646 = vunpack.c.l.b16 %v130
    %v647 = vunpack.c.h.b16 %v130
    %v648 = vunpack.c.l.b16 %v131
    %v649 = vunpack.c.h.b16 %v131
    %v650 = vunpack.c.l.b16 %v132
    %v651 = vunpack.c.h.b16 %v132
    %v652 = vunpack.c.l.b16 %v133
    %v653 = vunpack.c.h.b16 %v133
    %v654 = vunpack.c.l.b16 %v134
    %v655 = vunpack.c.h.b16 %v134
    %v656 = vunpack.c.l.b16 %v135
    %v657 = vunpack.c.h.b16 %v135
    %v658 = vunpack.c.l.b16 %v136
    %v659 = vunpack.c.h.b16 %v136
    %v660 = vunpack.c.l.b16 %v137
    %v661 = vunpack.c.h.b16 %v137
    %v662 = vunpack.c.l.b16 %v138
    %v663 = vunpack.c.h.b16 %v138
    %v664 = vunpack.c.l.b16 %v139
    %v665 = vunpack.c.h.b16 %v139
    %v666 = vunpack.c.l.b16 %v140
    %v667 = vunpack.c.h.b16 %v140
    %v668 = vunpack.c.l.b16 %v141
    %v669 = vunpack.c.h.b16 %v141
    %v670 = vunpack.c.l.b16 %v142
    %v671 = vunpack.c.h.b16 %v142
    %v672 = vunpack.c.l.b16 %v143
    %v673 = vunpack.c.h.b16 %v143
    %v674 = vunpack.c.l.b16 %v144
    %v675 = vunpack.c.h.b16 %v144
    %v676 = vunpack.c.l.b16 %v145
    %v677 = vunpack.c.h.b16 %v145
    %v678 = vunpack.c.l.b16 %v146
    %v679 = vunpack.c.h.b16 %v146
    %v680 = vunpack.c.l.b16 %v147
    %v681 = vunpack.c.h.b16 %v147
    %v682 = vunpack.c.l.b16 %v148
    %v683 = vunpack.c.h.b16 %v148
    %v684 = vunpack.c.l.b16 %v149
    %v685 = vunpack.c.h.b16 %v149
    %v686 = vunpack.c.l.b16 %v150
    %v687 = vunpack.c.h.b16 %v150
    %v688 = vunpack.c.l.b16 %v151
    %v689 = vunpack.c.h.b16 %v151
    %v690 = vunpack.c.l.b16 %v152
    %v691 = vunpack.c.h.b16 %v152
    %v692 = vunpack.c.l.b16 %v153
    %v693 = vunpack.c.h.b16 %v153
    %v694 = vunpack.c.l.b16 %v154
    %v695 = vunpack.c.h.b16 %v154
    %v696 = vunpack.c.l.b16 %v155
    %v697 = vunpack.c.h.b16 %v155
    %v698 = vunpack.c.l.b16 %v156
    %v699 = vunpack.c.h.b16 %v156
    %v700 = vunpack.c.l.b16 %v157
    %v701 = vunpack.c.h.b16 %v157
    %v702 = vunpack.c.l.b16 %v158
    %v703 = vunpack.c.h.b16 %v158
    %v704 = vunpack.c.l.b16 %v159
    %v705 = vunpack.c.h.b16 %v159
    %v706 = vunpack.c.l.b16 %v160
    %v707 = vunpack.c.h.b16 %v160
    %v708 = vunpack.c.l.b16 %v161
    %v709 = vunpack.c.h.b16 %v161
    %v710 = vunpack.c.l.b16 %v162
    %v711 = vunpack.c.h.b16 %v162
    %v712 = vunpack.c.l.b16 %v163
    %v713 = vunpack.c.h.b16 %v163
    %v714 = vunpack.c.l.b16 %v164
    %v715 = vunpack.c.h.b16 %v164
    %v716 = vunpack.c.l.b16 %v165
    %v717 = vunpack.c.h.b16 %v165
    %v718 = vunpack.c.l.b16 %v166
    %v719 = vunpack.c.h.b16 %v166
    %v720 = vunpack.c.l.b16 %v167
    %v721 = vunpack.c.h.b16 %v167
    %v722 = vunpack.c.l.b16 %v168
    %v723 = vunpack.c.h.b16 %v168
    %v724 = vunpack.c.l.b16 %v169
    %v725 = vunpack.c.h.b16 %v169
    %v726 = vunpack.c.l.b16 %v170
    %v727 = vunpack.c.h.b16 %v170
    %v728 = vunpack.c.l.b16 %v171
    %v729 = vunpack.c.h.b16 %v171
    %v730 = vunpack.c.l.b16 %v172
    %v731 = vunpack.c.h.b16 %v172
    %v732 = vunpack.c.l.b16 %v173
    %v733 = vunpack.c.h.b16 %v173
    %v734 = vpack.c.b16 %v596, %v590
    %v735 = vpack.c.b16 %v597, %v591
    %v736 = vpack.c.b16 %v598, %v592
    %v737 = vpack.c.b16 %v599, %v593
    %v738 = vpack.c.b16 %v600, %v594
    %v739 = vpack.c.b16 %v601, %v595
    %v740 = vpack.c.b16 %v608, %v602
    %v741 = vpack.c.b16 %v609, %v603
    %v742 = vpack.c.b16 %v610, %v604
    %v743 = vpack.c.b16 %v611, %v605
    %v744 = vpack.c.b16 %v612, %v606
    %v745 = vpack.c.b16 %v613, %v607
    %v746 = vpack.c.b16 %v620, %v614
    %v747 = vpack.c.b16 %v621, %v615
    %v748 = vpack.c.b16 %v622, %v616
    %v749 = vpack.c.b16 %v623, %v617
    %v750 = vpack.c.b16 %v624, %v618
    %v751 = vpack.c.b16 %v625, %v619
    %v752 = vpack.c.b16 %v632, %v626
    %v753 = vpack.c.b16 %v633, %v627
    %v754 = vpack.c.b16 %v634, %v628
    %v755 = vpack.c.b16 %v635, %v629
    %v756 = vpack.c.b16 %v636, %v630
    %v757 = vpack.c.b16 %v637, %v631
    %v758 = vpack.c.b16 %v644, %v638
    %v759 = vpack.c.b16 %v645, %v639
    %v760 = vpack.c.b16 %v646, %v640
    %v761 = vpack.c.b16 %v647, %v641
    %v762 = vpack.c.b16 %v648, %v642
    %v763 = vpack.c.b16 %v649, %v643
    %v764 = vpack.c.b16 %v656, %v650
    %v765 = vpack.c.b16 %v657, %v651
    %v766 = vpack.c.b16 %v658, %v652
    %v767 = vpack.c.b16 %v659, %v653
    %v768 = vpack.c.b16 %v660, %v654
    %v769 = vpack.c.b16 %v661, %v655
    %v770 = vpack.c.b16 %v668, %v662
    %v771 = vpack.c.b16 %v669, %v663
    %v772 = vpack.c.b16 %v670, %v664
    %v773 = vpack.c.b16 %v671, %v665
    %v774 = vpack.c.b16 %v672, %v666
    %v775 = vpack.c.b16 %v673, %v667
    %v776 = vpack.c.b16 %v680, %v674
    %v777 = vpack.c.b16 %v681, %v675
    %v778 = vpack.c.b16 %v682, %v676
    %v779 = vpack.c.b16 %v683, %v677
    %v780 = vpack.c.b16 %v684, %v678
    %v781 = vpack.c.b16 %v685, %v679
    %v782 = vpack.c.b16 %v692, %v686
    %v783 = vpack.c.b16 %v693, %v687
    %v784 = vpack.c.b16 %v694, %v688
    %v785 = vpack.c.b16 %v695, %v689
    %v786 = vpack.c.b16 %v696, %v690
    %v787 = vpack.c.b16 %v697, %v691
    %v788 = vpack.c.b16 %v704, %v698
    %v789 = vpack.c.b16 %v705, %v699
    %v790 = vpack.c.b16 %v706, %v700
    %v791 = vpack.c.b16 %v707, %v701
    %v792 = vpack.c.b16 %v708, %v702
    %v793 = vpack.c.b16 %v709, %v703
    %v794 = vpack.c.b16 %v716, %v710
    %v795 = vpack.c.b16 %v717, %v711
    %v796 = vpack.c.b16 %v718, %v712
    %v797 = vpack.c.b16 %v719, %v713
    %v798 = vpack.c.b16 %v720, %v714
    %v799 = vpack.c.b16 %v721, %v715
    %v800 = vpack.c.b16 %v728, %v722
    %v801 = vpack.c.b16 %v729, %v723
    %v802 = vpack.c.b16 %v730, %v724
    %v803 = vpack.c.b16 %v731, %v725
    %v804 = vpack.c.b16 %v732, %v726
    %v805 = vpack.c.b16 %v733, %v727
    %vm878 = vcmask 523264
    %v880 = vsel %vm878, %v517, 0
    %882 = vmatprep.subr.bf16.mxu0 %v777
    %883 = vmatpush1.bf16.msra.mxu0 %v776
    %884 = vmatprep.subr.bf16.mxu0 %v771
    %885 = vmatpush1.bf16.msra.mxu0 %v770
    %886 = vmatprep.subr.bf16.mxu0 %v765
    %887 = vmatpush1.bf16.msra.mxu0 %v764
    %888 = vmatprep.subr.bf16.mxu0 %v759
    %889 = vmatpush1.bf16.msra.mxu0 %v758
    %890 = vmatprep.subr.bf16.mxu0 %v753
    %891 = vmatpush1.bf16.msra.mxu0 %v752
    %892 = vmatprep.subr.bf16.mxu0 %v747
    %893 = vmatpush1.bf16.msra.mxu0 %v746
    %894 = vmatprep.subr.bf16.mxu0 %v741
    %895 = vmatpush1.bf16.msra.mxu0 %v740
    %896 = vmatprep.subr.bf16.mxu0 %v735
    %897 = vmatpush1.bf16.msra.mxu0 %v734
    %898 = vmatprep.subr.bf16.mxu0 0
    %899 = vmatpush2.bf16.msra.mxu0 0
    %900 = vmatprep.subr.bf16.mxu0 0
    %901 = vmatpush2.bf16.msra.mxu0 0
    %902 = vmatprep.subr.bf16.mxu0 0
    %903 = vmatpush2.bf16.msra.mxu0 0
    %904 = vmatprep.subr.bf16.mxu0 0
    %905 = vmatpush2.bf16.msra.mxu0 0
    %906 = vmatprep.subr.bf16.mxu0 %v801
    %907 = vmatpush2.bf16.msra.mxu0 %v800
    %908 = vmatprep.subr.bf16.mxu0 %v795
    %909 = vmatpush2.bf16.msra.mxu0 %v794
    %910 = vmatprep.subr.bf16.mxu0 %v789
    %911 = vmatpush2.bf16.msra.mxu0 %v788
    %912 = vmatprep.subr.bf16.mxu0 %v783
    %913 = vmatpush2.bf16.msra.mxu0 %v782
    %914 = vmatprep.mubr.bf16.mxu0 %v880
    %915 = vmatmul.mubr.bf16.gmra.mxu0 %v516
    %v916 = vpop.f32.mrf.mxu0
    %v917 = vadd.f32 0.0, %v916
    %v918 = vpop.f32.mrf.mxu0
    %v919 = vadd.f32 0.0, %v918
    %v920 = vpop.f32.mrf.mxu0
    %v921 = vpop.f32.mrf.mxu0
    %922 = vdwg.mxu0
    %923 = vmatprep.subr.bf16.mxu0 %v779
    %924 = vmatpush1.bf16.msra.mxu0 %v778
    %925 = vmatprep.subr.bf16.mxu0 %v773
    %926 = vmatpush1.bf16.msra.mxu0 %v772
    %927 = vmatprep.subr.bf16.mxu0 %v767
    %928 = vmatpush1.bf16.msra.mxu0 %v766
    %929 = vmatprep.subr.bf16.mxu0 %v761
    %930 = vmatpush1.bf16.msra.mxu0 %v760
    %931 = vmatprep.subr.bf16.mxu0 %v755
    %932 = vmatpush1.bf16.msra.mxu0 %v754
    %933 = vmatprep.subr.bf16.mxu0 %v749
    %934 = vmatpush1.bf16.msra.mxu0 %v748
    %935 = vmatprep.subr.bf16.mxu0 %v743
    %936 = vmatpush1.bf16.msra.mxu0 %v742
    %937 = vmatprep.subr.bf16.mxu0 %v737
    %938 = vmatpush1.bf16.msra.mxu0 %v736
    %939 = vmatprep.subr.bf16.mxu0 0
    %940 = vmatpush2.bf16.msra.mxu0 0
    %941 = vmatprep.subr.bf16.mxu0 0
    %942 = vmatpush2.bf16.msra.mxu0 0
    %943 = vmatprep.subr.bf16.mxu0 0
    %944 = vmatpush2.bf16.msra.mxu0 0
    %945 = vmatprep.subr.bf16.mxu0 0
    %946 = vmatpush2.bf16.msra.mxu0 0
    %947 = vmatprep.subr.bf16.mxu0 %v803
    %948 = vmatpush2.bf16.msra.mxu0 %v802
    %949 = vmatprep.subr.bf16.mxu0 %v797
    %950 = vmatpush2.bf16.msra.mxu0 %v796
    %951 = vmatprep.subr.bf16.mxu0 %v791
    %952 = vmatpush2.bf16.msra.mxu0 %v790
    %953 = vmatprep.subr.bf16.mxu0 %v785
    %954 = vmatpush2.bf16.msra.mxu0 %v784
    %955 = vmatprep.mubr.bf16.mxu0 %v880
    %956 = vmatmul.mubr.bf16.gmra.mxu0 %v516
    %v957 = vpop.f32.mrf.mxu0
    %v958 = vadd.f32 0.0, %v957
    %v959 = vpop.f32.mrf.mxu0
    %v960 = vadd.f32 0.0, %v959
    %v961 = vpop.f32.mrf.mxu0
    %v962 = vpop.f32.mrf.mxu0
    %963 = vdwg.mxu0
    %964 = vmatprep.subr.bf16.mxu0 %v781
    %965 = vmatpush1.bf16.msra.mxu0 %v780
    %966 = vmatprep.subr.bf16.mxu0 %v775
    %967 = vmatpush1.bf16.msra.mxu0 %v774
    %968 = vmatprep.subr.bf16.mxu0 %v769
    %969 = vmatpush1.bf16.msra.mxu0 %v768
    %970 = vmatprep.subr.bf16.mxu0 %v763
    %971 = vmatpush1.bf16.msra.mxu0 %v762
    %972 = vmatprep.subr.bf16.mxu0 %v757
    %973 = vmatpush1.bf16.msra.mxu0 %v756
    %974 = vmatprep.subr.bf16.mxu0 %v751
    %975 = vmatpush1.bf16.msra.mxu0 %v750
    %976 = vmatprep.subr.bf16.mxu0 %v745
    %977 = vmatpush1.bf16.msra.mxu0 %v744
    %978 = vmatprep.subr.bf16.mxu0 %v739
    %979 = vmatpush1.bf16.msra.mxu0 %v738
    %980 = vmatprep.subr.bf16.mxu0 0
    %981 = vmatpush2.bf16.msra.mxu0 0
    %982 = vmatprep.subr.bf16.mxu0 0
    %983 = vmatpush2.bf16.msra.mxu0 0
    %984 = vmatprep.subr.bf16.mxu0 0
    %985 = vmatpush2.bf16.msra.mxu0 0
    %986 = vmatprep.subr.bf16.mxu0 0
    %987 = vmatpush2.bf16.msra.mxu0 0
    %988 = vmatprep.subr.bf16.mxu0 %v805
    %989 = vmatpush2.bf16.msra.mxu0 %v804
    %990 = vmatprep.subr.bf16.mxu0 %v799
    %991 = vmatpush2.bf16.msra.mxu0 %v798
    %992 = vmatprep.subr.bf16.mxu0 %v793
    %993 = vmatpush2.bf16.msra.mxu0 %v792
    %994 = vmatprep.subr.bf16.mxu0 %v787
    %995 = vmatpush2.bf16.msra.mxu0 %v786
    %996 = vmatprep.mubr.bf16.mxu0 %v880
    %997 = vmatmul.mubr.bf16.gmra.mxu0 %v516
    %v998 = vpop.f32.mrf.mxu0
    %v999 = vadd.f32 0.0, %v998
    %v1000 = vpop.f32.mrf.mxu0
    %v1001 = vadd.f32 0.0, %v1000
    %v1002 = vpop.f32.mrf.mxu0
    %v1003 = vpop.f32.mrf.mxu0
    %1004 = vdwg.mxu0
    %v1007 = vunpack.c.l.s4 1983009808
    %v1008 = vunpack.c.0.s8 %v1007
    %v1009 = vlaneseq
    %v1010 = vshrl.u32 %v1009, 7
    %v1011 = vsub.s32 %v1008, %v1010
    %v1012 = vrot.slane %v68, %v1011
    %v1013 = vcombine.high %v1012, %v1012
    %v1016 = vpack.c.bf16 %v1012, %v1012
    %v1017 = vpack.c.bf16 %v1013, %v1013
    %v1090 = vunpack.c.l.b16 %v174
    %v1091 = vunpack.c.h.b16 %v174
    %v1092 = vunpack.c.l.b16 %v175
    %v1093 = vunpack.c.h.b16 %v175
    %v1094 = vunpack.c.l.b16 %v176
    %v1095 = vunpack.c.h.b16 %v176
    %v1096 = vunpack.c.l.b16 %v177
    %v1097 = vunpack.c.h.b16 %v177
    %v1098 = vunpack.c.l.b16 %v178
    %v1099 = vunpack.c.h.b16 %v178
    %v1100 = vunpack.c.l.b16 %v179
    %v1101 = vunpack.c.h.b16 %v179
    %v1102 = vunpack.c.l.b16 %v180
    %v1103 = vunpack.c.h.b16 %v180
    %v1104 = vunpack.c.l.b16 %v181
    %v1105 = vunpack.c.h.b16 %v181
    %v1106 = vunpack.c.l.b16 %v182
    %v1107 = vunpack.c.h.b16 %v182
    %v1108 = vunpack.c.l.b16 %v183
    %v1109 = vunpack.c.h.b16 %v183
    %v1110 = vunpack.c.l.b16 %v184
    %v1111 = vunpack.c.h.b16 %v184
    %v1112 = vunpack.c.l.b16 %v185
    %v1113 = vunpack.c.h.b16 %v185
    %v1114 = vunpack.c.l.b16 %v186
    %v1115 = vunpack.c.h.b16 %v186
    %v1116 = vunpack.c.l.b16 %v187
    %v1117 = vunpack.c.h.b16 %v187
    %v1118 = vunpack.c.l.b16 %v188
    %v1119 = vunpack.c.h.b16 %v188
    %v1120 = vunpack.c.l.b16 %v189
    %v1121 = vunpack.c.h.b16 %v189
    %v1122 = vunpack.c.l.b16 %v190
    %v1123 = vunpack.c.h.b16 %v190
    %v1124 = vunpack.c.l.b16 %v191
    %v1125 = vunpack.c.h.b16 %v191
    %v1126 = vunpack.c.l.b16 %v192
    %v1127 = vunpack.c.h.b16 %v192
    %v1128 = vunpack.c.l.b16 %v193
    %v1129 = vunpack.c.h.b16 %v193
    %v1130 = vunpack.c.l.b16 %v194
    %v1131 = vunpack.c.h.b16 %v194
    %v1132 = vunpack.c.l.b16 %v195
    %v1133 = vunpack.c.h.b16 %v195
    %v1134 = vunpack.c.l.b16 %v196
    %v1135 = vunpack.c.h.b16 %v196
    %v1136 = vunpack.c.l.b16 %v197
    %v1137 = vunpack.c.h.b16 %v197
    %v1138 = vunpack.c.l.b16 %v198
    %v1139 = vunpack.c.h.b16 %v198
    %v1140 = vunpack.c.l.b16 %v199
    %v1141 = vunpack.c.h.b16 %v199
    %v1142 = vunpack.c.l.b16 %v200
    %v1143 = vunpack.c.h.b16 %v200
    %v1144 = vunpack.c.l.b16 %v201
    %v1145 = vunpack.c.h.b16 %v201
    %v1146 = vunpack.c.l.b16 %v202
    %v1147 = vunpack.c.h.b16 %v202
    %v1148 = vunpack.c.l.b16 %v203
    %v1149 = vunpack.c.h.b16 %v203
    %v1150 = vunpack.c.l.b16 %v204
    %v1151 = vunpack.c.h.b16 %v204
    %v1152 = vunpack.c.l.b16 %v205
    %v1153 = vunpack.c.h.b16 %v205
    %v1154 = vunpack.c.l.b16 %v206
    %v1155 = vunpack.c.h.b16 %v206
    %v1156 = vunpack.c.l.b16 %v207
    %v1157 = vunpack.c.h.b16 %v207
    %v1158 = vunpack.c.l.b16 %v208
    %v1159 = vunpack.c.h.b16 %v208
    %v1160 = vunpack.c.l.b16 %v209
    %v1161 = vunpack.c.h.b16 %v209
    %v1162 = vunpack.c.l.b16 %v210
    %v1163 = vunpack.c.h.b16 %v210
    %v1164 = vunpack.c.l.b16 %v211
    %v1165 = vunpack.c.h.b16 %v211
    %v1166 = vunpack.c.l.b16 %v212
    %v1167 = vunpack.c.h.b16 %v212
    %v1168 = vunpack.c.l.b16 %v213
    %v1169 = vunpack.c.h.b16 %v213
    %v1170 = vunpack.c.l.b16 %v214
    %v1171 = vunpack.c.h.b16 %v214
    %v1172 = vunpack.c.l.b16 %v215
    %v1173 = vunpack.c.h.b16 %v215
    %v1174 = vunpack.c.l.b16 %v216
    %v1175 = vunpack.c.h.b16 %v216
    %v1176 = vunpack.c.l.b16 %v217
    %v1177 = vunpack.c.h.b16 %v217
    %v1178 = vunpack.c.l.b16 %v218
    %v1179 = vunpack.c.h.b16 %v218
    %v1180 = vunpack.c.l.b16 %v219
    %v1181 = vunpack.c.h.b16 %v219
    %v1182 = vunpack.c.l.b16 %v220
    %v1183 = vunpack.c.h.b16 %v220
    %v1184 = vunpack.c.l.b16 %v221
    %v1185 = vunpack.c.h.b16 %v221
    %v1186 = vunpack.c.l.b16 %v222
    %v1187 = vunpack.c.h.b16 %v222
    %v1188 = vunpack.c.l.b16 %v223
    %v1189 = vunpack.c.h.b16 %v223
    %v1190 = vunpack.c.l.b16 %v224
    %v1191 = vunpack.c.h.b16 %v224
    %v1192 = vunpack.c.l.b16 %v225
    %v1193 = vunpack.c.h.b16 %v225
    %v1194 = vunpack.c.l.b16 %v226
    %v1195 = vunpack.c.h.b16 %v226
    %v1196 = vunpack.c.l.b16 %v227
    %v1197 = vunpack.c.h.b16 %v227
    %v1198 = vunpack.c.l.b16 %v228
    %v1199 = vunpack.c.h.b16 %v228
    %v1200 = vunpack.c.l.b16 %v229
    %v1201 = vunpack.c.h.b16 %v229
    %v1202 = vunpack.c.l.b16 %v230
    %v1203 = vunpack.c.h.b16 %v230
    %v1204 = vunpack.c.l.b16 %v231
    %v1205 = vunpack.c.h.b16 %v231
    %v1206 = vunpack.c.l.b16 %v232
    %v1207 = vunpack.c.h.b16 %v232
    %v1208 = vunpack.c.l.b16 %v233
    %v1209 = vunpack.c.h.b16 %v233
    %v1210 = vunpack.c.l.b16 %v234
    %v1211 = vunpack.c.h.b16 %v234
    %v1212 = vunpack.c.l.b16 %v235
    %v1213 = vunpack.c.h.b16 %v235
    %v1214 = vunpack.c.l.b16 %v236
    %v1215 = vunpack.c.h.b16 %v236
    %v1216 = vunpack.c.l.b16 %v237
    %v1217 = vunpack.c.h.b16 %v237
    %v1218 = vunpack.c.l.b16 %v238
    %v1219 = vunpack.c.h.b16 %v238
    %v1220 = vunpack.c.l.b16 %v239
    %v1221 = vunpack.c.h.b16 %v239
    %v1222 = vunpack.c.l.b16 %v240
    %v1223 = vunpack.c.h.b16 %v240
    %v1224 = vunpack.c.l.b16 %v241
    %v1225 = vunpack.c.h.b16 %v241
    %v1226 = vunpack.c.l.b16 %v242
    %v1227 = vunpack.c.h.b16 %v242
    %v1228 = vunpack.c.l.b16 %v243
    %v1229 = vunpack.c.h.b16 %v243
    %v1230 = vunpack.c.l.b16 %v244
    %v1231 = vunpack.c.h.b16 %v244
    %v1232 = vunpack.c.l.b16 %v245
    %v1233 = vunpack.c.h.b16 %v245
    %v1234 = vpack.c.b16 %v1096, %v1090
    %v1235 = vpack.c.b16 %v1097, %v1091
    %v1236 = vpack.c.b16 %v1098, %v1092
    %v1237 = vpack.c.b16 %v1099, %v1093
    %v1238 = vpack.c.b16 %v1100, %v1094
    %v1239 = vpack.c.b16 %v1101, %v1095
    %v1240 = vpack.c.b16 %v1108, %v1102
    %v1241 = vpack.c.b16 %v1109, %v1103
    %v1242 = vpack.c.b16 %v1110, %v1104
    %v1243 = vpack.c.b16 %v1111, %v1105
    %v1244 = vpack.c.b16 %v1112, %v1106
    %v1245 = vpack.c.b16 %v1113, %v1107
    %v1246 = vpack.c.b16 %v1120, %v1114
    %v1247 = vpack.c.b16 %v1121, %v1115
    %v1248 = vpack.c.b16 %v1122, %v1116
    %v1249 = vpack.c.b16 %v1123, %v1117
    %v1250 = vpack.c.b16 %v1124, %v1118
    %v1251 = vpack.c.b16 %v1125, %v1119
    %v1252 = vpack.c.b16 %v1132, %v1126
    %v1253 = vpack.c.b16 %v1133, %v1127
    %v1254 = vpack.c.b16 %v1134, %v1128
    %v1255 = vpack.c.b16 %v1135, %v1129
    %v1256 = vpack.c.b16 %v1136, %v1130
    %v1257 = vpack.c.b16 %v1137, %v1131
    %v1258 = vpack.c.b16 %v1144, %v1138
    %v1259 = vpack.c.b16 %v1145, %v1139
    %v1260 = vpack.c.b16 %v1146, %v1140
    %v1261 = vpack.c.b16 %v1147, %v1141
    %v1262 = vpack.c.b16 %v1148, %v1142
    %v1263 = vpack.c.b16 %v1149, %v1143
    %v1264 = vpack.c.b16 %v1156, %v1150
    %v1265 = vpack.c.b16 %v1157, %v1151
    %v1266 = vpack.c.b16 %v1158, %v1152
    %v1267 = vpack.c.b16 %v1159, %v1153
    %v1268 = vpack.c.b16 %v1160, %v1154
    %v1269 = vpack.c.b16 %v1161, %v1155
    %v1270 = vpack.c.b16 %v1168, %v1162
    %v1271 = vpack.c.b16 %v1169, %v1163
    %v1272 = vpack.c.b16 %v1170, %v1164
    %v1273 = vpack.c.b16 %v1171, %v1165
    %v1274 = vpack.c.b16 %v1172, %v1166
    %v1275 = vpack.c.b16 %v1173, %v1167
    %v1276 = vpack.c.b16 %v1180, %v1174
    %v1277 = vpack.c.b16 %v1181, %v1175
    %v1278 = vpack.c.b16 %v1182, %v1176
    %v1279 = vpack.c.b16 %v1183, %v1177
    %v1280 = vpack.c.b16 %v1184, %v1178
    %v1281 = vpack.c.b16 %v1185, %v1179
    %v1282 = vpack.c.b16 %v1192, %v1186
    %v1283 = vpack.c.b16 %v1193, %v1187
    %v1284 = vpack.c.b16 %v1194, %v1188
    %v1285 = vpack.c.b16 %v1195, %v1189
    %v1286 = vpack.c.b16 %v1196, %v1190
    %v1287 = vpack.c.b16 %v1197, %v1191
    %v1288 = vpack.c.b16 %v1204, %v1198
    %v1289 = vpack.c.b16 %v1205, %v1199
    %v1290 = vpack.c.b16 %v1206, %v1200
    %v1291 = vpack.c.b16 %v1207, %v1201
    %v1292 = vpack.c.b16 %v1208, %v1202
    %v1293 = vpack.c.b16 %v1209, %v1203
    %v1294 = vpack.c.b16 %v1216, %v1210
    %v1295 = vpack.c.b16 %v1217, %v1211
    %v1296 = vpack.c.b16 %v1218, %v1212
    %v1297 = vpack.c.b16 %v1219, %v1213
    %v1298 = vpack.c.b16 %v1220, %v1214
    %v1299 = vpack.c.b16 %v1221, %v1215
    %v1300 = vpack.c.b16 %v1228, %v1222
    %v1301 = vpack.c.b16 %v1229, %v1223
    %v1302 = vpack.c.b16 %v1230, %v1224
    %v1303 = vpack.c.b16 %v1231, %v1225
    %v1304 = vpack.c.b16 %v1232, %v1226
    %v1305 = vpack.c.b16 %v1233, %v1227
    %v1379 = vsel %vm878, %v1017, 0
    %1381 = vmatprep.subr.bf16.mxu0 %v1277
    %1382 = vmatpush1.bf16.msra.mxu0 %v1276
    %1383 = vmatprep.subr.bf16.mxu0 %v1271
    %1384 = vmatpush1.bf16.msra.mxu0 %v1270
    %1385 = vmatprep.subr.bf16.mxu0 %v1265
    %1386 = vmatpush1.bf16.msra.mxu0 %v1264
    %1387 = vmatprep.subr.bf16.mxu0 %v1259
    %1388 = vmatpush1.bf16.msra.mxu0 %v1258
    %1389 = vmatprep.subr.bf16.mxu0 %v1253
    %1390 = vmatpush1.bf16.msra.mxu0 %v1252
    %1391 = vmatprep.subr.bf16.mxu0 %v1247
    %1392 = vmatpush1.bf16.msra.mxu0 %v1246
    %1393 = vmatprep.subr.bf16.mxu0 %v1241
    %1394 = vmatpush1.bf16.msra.mxu0 %v1240
    %1395 = vmatprep.subr.bf16.mxu0 %v1235
    %1396 = vmatpush1.bf16.msra.mxu0 %v1234
    %1397 = vmatprep.subr.bf16.mxu0 0
    %1398 = vmatpush2.bf16.msra.mxu0 0
    %1399 = vmatprep.subr.bf16.mxu0 0
    %1400 = vmatpush2.bf16.msra.mxu0 0
    %1401 = vmatprep.subr.bf16.mxu0 0
    %1402 = vmatpush2.bf16.msra.mxu0 0
    %1403 = vmatprep.subr.bf16.mxu0 0
    %1404 = vmatpush2.bf16.msra.mxu0 0
    %1405 = vmatprep.subr.bf16.mxu0 %v1301
    %1406 = vmatpush2.bf16.msra.mxu0 %v1300
    %1407 = vmatprep.subr.bf16.mxu0 %v1295
    %1408 = vmatpush2.bf16.msra.mxu0 %v1294
    %1409 = vmatprep.subr.bf16.mxu0 %v1289
    %1410 = vmatpush2.bf16.msra.mxu0 %v1288
    %1411 = vmatprep.subr.bf16.mxu0 %v1283
    %1412 = vmatpush2.bf16.msra.mxu0 %v1282
    %1413 = vmatprep.mubr.bf16.mxu0 %v1379
    %1414 = vmatmul.mubr.bf16.gmra.mxu0 %v1016
    %v1415 = vpop.f32.mrf.mxu0
    %v1416 = vadd.f32 0.0, %v1415
    %v1417 = vpop.f32.mrf.mxu0
    %v1418 = vadd.f32 0.0, %v1417
    %v1419 = vpop.f32.mrf.mxu0
    %v1420 = vpop.f32.mrf.mxu0
    %1421 = vdwg.mxu0
    %1422 = vmatprep.subr.bf16.mxu0 %v1279
    %1423 = vmatpush1.bf16.msra.mxu0 %v1278
    %1424 = vmatprep.subr.bf16.mxu0 %v1273
    %1425 = vmatpush1.bf16.msra.mxu0 %v1272
    %1426 = vmatprep.subr.bf16.mxu0 %v1267
    %1427 = vmatpush1.bf16.msra.mxu0 %v1266
    %1428 = vmatprep.subr.bf16.mxu0 %v1261
    %1429 = vmatpush1.bf16.msra.mxu0 %v1260
    %1430 = vmatprep.subr.bf16.mxu0 %v1255
    %1431 = vmatpush1.bf16.msra.mxu0 %v1254
    %1432 = vmatprep.subr.bf16.mxu0 %v1249
    %1433 = vmatpush1.bf16.msra.mxu0 %v1248
    %1434 = vmatprep.subr.bf16.mxu0 %v1243
    %1435 = vmatpush1.bf16.msra.mxu0 %v1242
    %1436 = vmatprep.subr.bf16.mxu0 %v1237
    %1437 = vmatpush1.bf16.msra.mxu0 %v1236
    %1438 = vmatprep.subr.bf16.mxu0 0
    %1439 = vmatpush2.bf16.msra.mxu0 0
    %1440 = vmatprep.subr.bf16.mxu0 0
    %1441 = vmatpush2.bf16.msra.mxu0 0
    %1442 = vmatprep.subr.bf16.mxu0 0
    %1443 = vmatpush2.bf16.msra.mxu0 0
    %1444 = vmatprep.subr.bf16.mxu0 0
    %1445 = vmatpush2.bf16.msra.mxu0 0
    %1446 = vmatprep.subr.bf16.mxu0 %v1303
    %1447 = vmatpush2.bf16.msra.mxu0 %v1302
    %1448 = vmatprep.subr.bf16.mxu0 %v1297
    %1449 = vmatpush2.bf16.msra.mxu0 %v1296
    %1450 = vmatprep.subr.bf16.mxu0 %v1291
    %1451 = vmatpush2.bf16.msra.mxu0 %v1290
    %1452 = vmatprep.subr.bf16.mxu0 %v1285
    %1453 = vmatpush2.bf16.msra.mxu0 %v1284
    %1454 = vmatprep.mubr.bf16.mxu0 %v1379
    %1455 = vmatmul.mubr.bf16.gmra.mxu0 %v1016
    %v1456 = vpop.f32.mrf.mxu0
    %v1457 = vadd.f32 0.0, %v1456
    %v1458 = vpop.f32.mrf.mxu0
    %v1459 = vadd.f32 0.0, %v1458
    %v1460 = vpop.f32.mrf.mxu0
    %v1461 = vpop.f32.mrf.mxu0
    %1462 = vdwg.mxu0
    %1463 = vmatprep.subr.bf16.mxu0 %v1281
    %1464 = vmatpush1.bf16.msra.mxu0 %v1280
    %1465 = vmatprep.subr.bf16.mxu0 %v1275
    %1466 = vmatpush1.bf16.msra.mxu0 %v1274
    %1467 = vmatprep.subr.bf16.mxu0 %v1269
    %1468 = vmatpush1.bf16.msra.mxu0 %v1268
    %1469 = vmatprep.subr.bf16.mxu0 %v1263
    %1470 = vmatpush1.bf16.msra.mxu0 %v1262
    %1471 = vmatprep.subr.bf16.mxu0 %v1257
    %1472 = vmatpush1.bf16.msra.mxu0 %v1256
    %1473 = vmatprep.subr.bf16.mxu0 %v1251
    %1474 = vmatpush1.bf16.msra.mxu0 %v1250
    %1475 = vmatprep.subr.bf16.mxu0 %v1245
    %1476 = vmatpush1.bf16.msra.mxu0 %v1244
    %1477 = vmatprep.subr.bf16.mxu0 %v1239
    %1478 = vmatpush1.bf16.msra.mxu0 %v1238
    %1479 = vmatprep.subr.bf16.mxu0 0
    %1480 = vmatpush2.bf16.msra.mxu0 0
    %1481 = vmatprep.subr.bf16.mxu0 0
    %1482 = vmatpush2.bf16.msra.mxu0 0
    %1483 = vmatprep.subr.bf16.mxu0 0
    %1484 = vmatpush2.bf16.msra.mxu0 0
    %1485 = vmatprep.subr.bf16.mxu0 0
    %1486 = vmatpush2.bf16.msra.mxu0 0
    %1487 = vmatprep.subr.bf16.mxu0 %v1305
    %1488 = vmatpush2.bf16.msra.mxu0 %v1304
    %1489 = vmatprep.subr.bf16.mxu0 %v1299
    %1490 = vmatpush2.bf16.msra.mxu0 %v1298
    %1491 = vmatprep.subr.bf16.mxu0 %v1293
    %1492 = vmatpush2.bf16.msra.mxu0 %v1292
    %1493 = vmatprep.subr.bf16.mxu0 %v1287
    %1494 = vmatpush2.bf16.msra.mxu0 %v1286
    %1495 = vmatprep.mubr.bf16.mxu0 %v1379
    %1496 = vmatmul.mubr.bf16.gmra.mxu0 %v1016
    %v1497 = vpop.f32.mrf.mxu0
    %v1498 = vadd.f32 0.0, %v1497
    %v1499 = vpop.f32.mrf.mxu0
    %v1500 = vadd.f32 0.0, %v1499
    %v1501 = vpop.f32.mrf.mxu0
    %v1502 = vpop.f32.mrf.mxu0
    %1503 = vdwg.mxu0
    %v1504 = vadd.f32 %v917, %v1416
    %v1505 = vadd.f32 %v919, %v1418
    %v1506 = vadd.f32 %v958, %v1457
    %v1507 = vadd.f32 %v960, %v1459
    %v1509 = vlaneseq
    %v1510 = vshrl.u32 %v1509, 7
    %v1511 = vsub.s32 0, %v1510
    %v1512 = vrot.slane %v246, %v1511
    %v1513 = vlaneseq
    %v1514 = vshrl.u32 %v1513, 7
    %v1515 = vsub.s32 1, %v1514
    %v1516 = vrot.slane %v246, %v1515
    %v1517 = vlaneseq
    %v1518 = vshrl.u32 %v1517, 7
    %v1519 = vsub.s32 2, %v1518
    %v1520 = vrot.slane %v246, %v1519
    %v1521 = vlaneseq
    %v1522 = vshrl.u32 %v1521, 7
    %v1523 = vsub.s32 3, %v1522
    %v1524 = vrot.slane %v246, %v1523
    %v1529 = vadd.f32 %v1504, %v1512
    %v1530 = vadd.f32 %v1505, %v1516
    %v1531 = vadd.f32 %v1506, %v1520
    %v1532 = vadd.f32 %v1507, %v1524
    %v1533 = vxor.u32 %v1529, 2147483648
    %v1534 = vxor.u32 %v1530, 2147483648
    %v1535 = vxor.u32 %v1531, 2147483648
    %v1536 = vxor.u32 %v1532, 2147483648
    %v1537 = vmul.f32 %v1533, 1.442695
    %v1538 = vpow.pop %v1537
    %v1539 = vmul.f32 %v1534, 1.442695
    %v1540 = vpow.pop %v1539
    %v1541 = vmul.f32 %v1535, 1.442695
    %v1542 = vpow.pop %v1541
    %v1543 = vmul.f32 %v1536, 1.442695
    %v1544 = vpow.pop %v1543
    %v1545 = vadd.f32 %v1538, 1.0
    %v1546 = vadd.f32 %v1540, 1.0
    %v1547 = vadd.f32 %v1542, 1.0
    %v1548 = vadd.f32 %v1544, 1.0
    %v1549 = vrcp.pop %v1545
    %v1550 = vmul.f32 1.0, %v1549
    %v1551 = vrcp.pop %v1546
    %v1552 = vmul.f32 1.0, %v1551
    %v1553 = vrcp.pop %v1547
    %v1554 = vmul.f32 1.0, %v1553
    %v1555 = vrcp.pop %v1548
    %v1556 = vmul.f32 1.0, %v1555
    %v1558 = vlaneseq
    %v1559 = vshrl.u32 %v1558, 7
    %v1560 = vsub.s32 0, %v1559
    %v1561 = vrot.slane %v247, %v1560
    %v1562 = vlaneseq
    %v1563 = vshrl.u32 %v1562, 7
    %v1564 = vsub.s32 1, %v1563
    %v1565 = vrot.slane %v247, %v1564
    %v1568 = vadd.f32 %v999, %v1561
    %v1569 = vadd.f32 %v1001, %v1565
    %v1571 = vlaneseq
    %v1572 = vshrl.u32 %v1571, 7
    %v1573 = vsub.s32 0, %v1572
    %v1574 = vrot.slane %v248, %v1573
    %v1575 = vlaneseq
    %v1576 = vshrl.u32 %v1575, 7
    %v1577 = vsub.s32 1, %v1576
    %v1578 = vrot.slane %v248, %v1577
    %v1581 = vadd.f32 %v1498, %v1574
    %v1582 = vadd.f32 %v1500, %v1578
    %v1583 = vmul.f32 %v1550, %v1581
    %v1584 = vmul.f32 %v1552, %v1582
    %v1585 = vadd.f32 %v1568, %v1583
    %v1586 = vadd.f32 %v1569, %v1584
    %v1587 = vtanh.pop %v1585
    %v1588 = vtanh.pop %v1586
    %v1589 = vsub.f32 1.0, %v1554
    %v1590 = vsub.f32 1.0, %v1556
    %v1591 = vmul.f32 %v1589, %v1587
    %v1592 = vmul.f32 %v1590, %v1588
    %v1593 = vmul.f32 %v1554, %v1012
    %v1594 = vmul.f32 %v1556, %v1013
    %v1595 = vadd.f32 %v1591, %v1593
    %v1596 = vadd.f32 %v1592, %v1594
    %vm1597 = vcmp.gt.f32.partialorder %v1595, 0.0
    %vm1598 = vcmp.gt.f32.partialorder %v1596, 0.0
    %v1599 = vmul.f32 %v1595, 0.05
    %v1600 = vmul.f32 %v1596, 0.05
    %v1601 = vsel %vm1597, %v1595, %v1599
    %v1602 = vsel %vm1598, %v1596, %v1600
    %v1603 = vpack.c.bf16 %v1601, %v1601
    %v1604 = vpack.c.bf16 %v1602, %v1602
    %v1629 = vunpack.c.l.b16 %v249
    %v1630 = vunpack.c.l.b16 %v250
    %v1631 = vunpack.c.l.b16 %v251
    %v1632 = vunpack.c.l.b16 %v252
    %v1633 = vunpack.c.l.b16 %v253
    %v1634 = vunpack.c.l.b16 %v254
    %v1635 = vunpack.c.l.b16 %v255
    %v1636 = vunpack.c.l.b16 %v256
    %v1637 = vunpack.c.l.b16 %v257
    %v1638 = vunpack.c.l.b16 %v258
    %v1639 = vunpack.c.l.b16 %v259
    %v1640 = vunpack.c.l.b16 %v260
    %v1641 = vunpack.c.l.b16 %v261
    %v1642 = vunpack.c.l.b16 %v262
    %v1643 = vunpack.c.l.b16 %v263
    %v1644 = vunpack.c.l.b16 %v264
    %v1645 = vunpack.c.l.b16 %v265
    %v1646 = vunpack.c.l.b16 %v266
    %v1647 = vunpack.c.l.b16 %v267
    %v1648 = vunpack.c.l.b16 %v268
    %v1649 = vunpack.c.l.b16 %v269
    %v1650 = vunpack.c.l.b16 %v270
    %v1651 = vunpack.c.l.b16 %v271
    %v1652 = vunpack.c.l.b16 %v272
    %v1653 = vpack.c.b16 %v1630, %v1629
    %v1654 = vpack.c.b16 %v1632, %v1631
    %v1655 = vpack.c.b16 %v1634, %v1633
    %v1656 = vpack.c.b16 %v1636, %v1635
    %v1657 = vpack.c.b16 %v1638, %v1637
    %v1658 = vpack.c.b16 %v1640, %v1639
    %v1659 = vpack.c.b16 %v1642, %v1641
    %v1660 = vpack.c.b16 %v1644, %v1643
    %v1661 = vpack.c.b16 %v1646, %v1645
    %v1662 = vpack.c.b16 %v1648, %v1647
    %v1663 = vpack.c.b16 %v1650, %v1649
    %v1664 = vpack.c.b16 %v1652, %v1651
    %v1678 = vsel %vm878, %v1604, 0
    %1680 = vmatprep.subr.bf16.mxu0 0
    %1681 = vmatpush1.bf16.msra.mxu0 %v1660
    %1682 = vmatprep.subr.bf16.mxu0 0
    %1683 = vmatpush1.bf16.msra.mxu0 %v1659
    %1684 = vmatprep.subr.bf16.mxu0 0
    %1685 = vmatpush1.bf16.msra.mxu0 %v1658
    %1686 = vmatprep.subr.bf16.mxu0 0
    %1687 = vmatpush1.bf16.msra.mxu0 %v1657
    %1688 = vmatprep.subr.bf16.mxu0 0
    %1689 = vmatpush1.bf16.msra.mxu0 %v1656
    %1690 = vmatprep.subr.bf16.mxu0 0
    %1691 = vmatpush1.bf16.msra.mxu0 %v1655
    %1692 = vmatprep.subr.bf16.mxu0 0
    %1693 = vmatpush1.bf16.msra.mxu0 %v1654
    %1694 = vmatprep.subr.bf16.mxu0 0
    %1695 = vmatpush1.bf16.msra.mxu0 %v1653
    %1696 = vmatprep.subr.bf16.mxu0 0
    %1697 = vmatpush2.bf16.msra.mxu0 0
    %1698 = vmatprep.subr.bf16.mxu0 0
    %1699 = vmatpush2.bf16.msra.mxu0 0
    %1700 = vmatprep.subr.bf16.mxu0 0
    %1701 = vmatpush2.bf16.msra.mxu0 0
    %1702 = vmatprep.subr.bf16.mxu0 0
    %1703 = vmatpush2.bf16.msra.mxu0 0
    %1704 = vmatprep.subr.bf16.mxu0 0
    %1705 = vmatpush2.bf16.msra.mxu0 %v1664
    %1706 = vmatprep.subr.bf16.mxu0 0
    %1707 = vmatpush2.bf16.msra.mxu0 %v1663
    %1708 = vmatprep.subr.bf16.mxu0 0
    %1709 = vmatpush2.bf16.msra.mxu0 %v1662
    %1710 = vmatprep.subr.bf16.mxu0 0
    %1711 = vmatpush2.bf16.msra.mxu0 %v1661
    %1712 = vmatprep.mubr.bf16.mxu0 %v1678
    %1713 = vmatmul.mubr.bf16.gmra.mxu0 %v1603
    %v1714 = vpop.f32.mrf.mxu0
    %v1715 = vadd.f32 0.0, %v1714
    %v1716 = vpop.f32.mrf.mxu0
    %v1717 = vpop.f32.mrf.mxu0
    %v1718 = vpop.f32.mrf.mxu0
    %1719 = vdwg.mxu0
    %v1720 = vtanh.pop %v1715
    %v1723 = vcombine.low %v1595, %v1596
    %v1725 = vunpack.c.l.s4 1983009808
    %v1726 = vunpack.c.0.s8 %v1725
    %v1727 = vlaneseq
    %v1728 = vshrl.u32 %v1727, 7
    %v1729 = vsub.s32 %v1726, %v1728
    %v1730 = vrot.slane %v1723, %v1729
    %vm1732 = vcmask 1041408
    %vm1733 = vcmask 519170
    %vm1734 = vmor %vm1733, %vm1732
    %1735 = vst.msk [vmem:[%s11] sm:$0xf] %vm1734, %v1730
    %1736 = vst [vmem:[#allocation7] sm:$0x3] %v1720
    // Predicated region
    $region50: #{_forward_step.1} parent=1 // pred_check
      _
    $region51: #{_forward_step.1} parent=1 // pred_check_branch
      %1738 = sbr.rel (0) target = $region53
    $region52: #{_forward_step.1} parent=1 // pred_region
      %s1740 = ssub.s32 32, 32
      %1741 = vsyncadd [#allocation4], %s1740
      %s1743 = sshll.u32 [#allocation7], 4
      %s1744 = int_to_ptr.vmem [resolvable:$true] %s1743
      %1746 = dma.vmem_to_hbm [thread:$0]  %s1744, 32, %s10, [#allocation4]
    $region53: #{_forward_step.1} parent=1 // pred_fallthru
      _
    // Predicated region
    $region54: #{_forward_step.1} parent=1 // pred_check
      _
    $region55: #{_forward_step.1} parent=1 // pred_check_branch
      %1748 = sbr.rel (0) target = $region57
    $region56: #{_forward_step.1} parent=1 // pred_region
      _
    $region57: #{_forward_step.1} parent=1 // pred_fallthru
      _
    // Predicated region
    $region58: #{_forward_step.1} parent=1 // pred_check
      _
    $region59: #{_forward_step.1} parent=1 // pred_check_branch
      %1750 = sbr.rel (0) target = $region61
    $region60: #{_forward_step.1} parent=1 // pred_region
      %1751 = dma.done [#allocation4], 32
    $region61: #{_forward_step.1} parent=1 // pred_fallthru
      _
    // Predicated region
    $region62: #{_forward_step.1} parent=1 // pred_check
      _
    $region63: #{_forward_step.1} parent=1 // pred_check_branch
      %1753 = sbr.rel (0) target = $region65
    $region64: #{_forward_step.1} parent=1 // pred_region
      _
    $region65: #{_forward_step.1} parent=1 // pred_fallthru
      _
    %1754 = vsyncpa [#allocation3], 1
    %1755 = vsyncpa [#allocation6], 1
    %1756 = vsyncpa [#allocation4], 1

</llo_original>
